<compile_context>
chip_gen: v6e
topology: v6e:2x2x1
jax: 0.10.0
libtpu: 0.0.40
codegen_flags: <defaults>
</compile_context>

<pallas_src>
import functools

import numpy as np

import jax
import jax.numpy as jnp
from jax import lax
from jax.experimental import pallas as pl
from jax.experimental.pallas import tpu as pltpu

NEG_SLOPE = 0.2      # LeakyReLU(0.2)


# ----------------------------------------------------------------------------
# Fused per-discriminator Pallas kernel
# ----------------------------------------------------------------------------
def _nlayer_disc_kernel(*refs, cfg, T, L, Lo, H_in):
    """Fused NLayerDiscriminator forward for one (batch row, L-tile) grid step.

    refs = (x_win, e_pad, o_pad, w_0..w_{n-1}, bias_pack,    # inputs
            feat_0..feat_{n-1}, pooled)                      # outputs

    x_win : (1, 1, T + 2*H_in)  input window of this tile (reflect + zero pad)
    e_pad : (1, 1, Lo + 2)      even samples of the raw input, zero-padded by 1
    o_pad : (1, 1, Lo + 2)      odd  samples of the raw input, zero-padded by 1
    w_i   : (Cout_i, K_i*Cin_i) bf16 im2col weights
    bias  : (n, Cmax, 1)        f32 packed biases
    feat_i: (1, Cout_i, T)      NCL output tile, lane-dense
    pooled: (1, 1, Lo)          next-scale input (AvgPool1d(4,2,1,cip=False))
    """
    n = len(cfg)
    x_ref = refs[0]
    e_ref = refs[1]
    o_ref = refs[2]
    w_refs = refs[3:3 + n]
    b_ref = refs[3 + n]
    out_refs = refs[4 + n:4 + 2 * n]
    pool_ref = refs[4 + 2 * n]

    t = pl.program_id(1)
    s = t * T                                    # absolute start of this output tile

    # -------- conv stack: channels-first, overlapping-halo (valid-conv) tiling
    h = x_ref[0].astype(jnp.float32)             # (1, T + 2*H_in)
    h_in = H_in
    for li, (K, cin, cout, pad, act) in enumerate(cfg):
        h_out = h_in - pad
        e_out = T + 2 * h_out                    # valid-conv output extent
        if cin == 1:
            # layer_0: contraction depth is only K (=15) -> VPU broadcast FMAs
            # beat a nearly-empty MXU.
            w0 = w_refs[li][...].astype(jnp.float32)        # (cout, K)
            y = jnp.zeros((cout, e_out), jnp.float32)
            for k in range(K):
                y = y + w0[:, k:k + 1] * h[:, k:k + e_out]
        else:
            hb = h.astype(jnp.bfloat16)                     # ONE cast at (cin, E_in)
            w = w_refs[li][...]                             # (cout, K*cin) bf16
            if cin >= 128:
                # Production channel counts: K accumulating matmuls straight off
                # the shifted windows (no Kx-duplicated im2col data in VMEM);
                # each tap already fills the MXU contraction depth.
                y = jnp.zeros((cout, e_out), jnp.float32)
                for k in range(K):
                    y = y + jnp.dot(w[:, k * cin:(k + 1) * cin],
                                    hb[:, k:k + e_out],
                                    preferred_element_type=jnp.float32)
            else:
                # Small cin: fold the K taps into ONE (K*cin)-deep MXU contraction.
                cols = jnp.concatenate([hb[:, k:k + e_out] for k in range(K)],
                                       axis=0)              # (K*cin, e_out) bf16
                y = jnp.dot(w, cols, preferred_element_type=jnp.float32)
        y = y + b_ref[li, 0:cout, :]                        # (cout, 1) bias broadcast
        if act:
            y = jnp.where(y >= 0, y, NEG_SLOPE * y)         # LeakyReLU(0.2)

        # Store this layer's feature-map tile (lane-dense, T lanes).
        out_refs[li][0] = y[:, h_out:h_out + T].astype(out_refs[li].dtype)

        if li + 1 < n:
            # Halo positions outside [0, L) must read as zero for the next
            # layer's zero padding (replaces the zero-filled staging scratch).
            pos = lax.broadcasted_iota(jnp.int32, (1, e_out), 1) + (s - h_out)
            h = jnp.where((pos >= 0) & (pos < L), y, 0.0)
        h_in = h_out

    # ---- fused AvgPool1d(4, stride=2, padding=1, count_include_pad=False) ----
    # Pure-VPU shifted adds over host-deinterleaved even/odd streams.  The
    # whole Lo row is computed once per batch row (t == 0); the pooled output
    # block has a constant index along t, so it stays VMEM-resident and is
    # flushed when the batch index changes.
    @pl.when(t == 0)
    def _():
        ev = e_ref[0]                                       # (1, Lo + 2)
        od = o_ref[0]
        s4 = od[:, 0:Lo] + ev[:, 1:Lo + 1] + od[:, 1:Lo + 1] + ev[:, 2:Lo + 2]
        j = lax.broadcasted_iota(jnp.int32, (1, Lo), 1)
        edge = (j == 0) | (j == Lo - 1)                     # count_include_pad=False
        pool_ref[0] = (s4 * jnp.where(edge, 1.0 / 3.0, 0.25)).astype(pool_ref.dtype)


# ----------------------------------------------------------------------------
# Wrappers
# ----------------------------------------------------------------------------
def _pick_tile(L, tile_l):
    """Lane-dense L tile: a multiple of 128 that divides L (or the whole row)."""
    if (tile_l is not None and 0 < tile_l <= L and L % tile_l == 0
            and (tile_l % 128 == 0 or tile_l == L)):
        return tile_l
    for T in (512, 256, 128):
        if L % T == 0:
            return T
    return L


def _run_nlayer_disc(x_ncl, disc, *, tile_l=None, out_dtype=None):
    """Run one fused NLayerDiscriminator scale.

    x_ncl: (B, 1, L) channels-first input.
    Returns ([feat_i of shape (B, Cout_i, L)], pooled (B, 1, L//2)).
    """
    B, _, L = x_ncl.shape
    assert L % 2 == 0, "AvgPool1d(4, stride=2, padding=1) path assumes even L"
    cfg = disc["cfg"]
    w_mats = disc["w_mats"]
    bpack = disc["bias_pack"]
    n = len(cfg)
    pads = [c[3] for c in cfg]
    pad0 = pads[0]
    H_in = sum(pads)                       # total receptive-field halo of the stack
    T = _pick_tile(L, tile_l)
    nt = L // T
    Lo = (L + 2 - 4) // 2 + 1
    dt = out_dtype if out_dtype is not None else x_ncl.dtype
    Wx = T + 2 * H_in

    # Host-side prep (O(B*L), negligible vs the conv stack):
    #  * reflect-pad by pad0, zero-pad out to the total halo, then cut the
    #    overlapping per-tile windows -> every grid step reads one contiguous,
    #    statically-indexed input block (no dynamic lane slicing in-kernel).
    #  * even/odd de-interleave (zero-padded by 1 sample) feeds the in-kernel
    #    VPU AvgPool, replacing the former O(L^2) pooling matrix.
    x_rp = jnp.pad(x_ncl, ((0, 0), (0, 0), (pad0, pad0)), mode="reflect")
    x_ext = jnp.pad(x_rp, ((0, 0), (0, 0), (H_in - pad0, H_in - pad0)))
    x_win = jnp.stack([x_ext[:, 0, i * T:i * T + Wx] for i in range(nt)], axis=1)
    x_win = x_win.reshape(B * nt, 1, Wx)
    e_pad = jnp.pad(x_ncl[:, :, 0::2], ((0, 0), (0, 0), (1, 1)))
    o_pad = jnp.pad(x_ncl[:, :, 1::2], ((0, 0), (0, 0), (1, 1)))

    in_specs = [pl.BlockSpec((1, 1, Wx), lambda b, t: (b * nt + t, 0, 0)),
                pl.BlockSpec((1, 1, Lo + 2), lambda b, t: (b, 0, 0)),
                pl.BlockSpec((1, 1, Lo + 2), lambda b, t: (b, 0, 0))]
    for wm in w_mats:
        in_specs.append(pl.BlockSpec(wm.shape, lambda b, t: (0, 0)))
    in_specs.append(pl.BlockSpec(bpack.shape, lambda b, t: (0, 0, 0)))

    out_shapes = tuple(jax.ShapeDtypeStruct((B, c[2], L), dt) for c in cfg) + (
        jax.ShapeDtypeStruct((B, 1, Lo), dt),)
    out_specs = tuple(pl.BlockSpec((1, c[2], T), lambda b, t: (b, 0, t)) for c in cfg) + (
        pl.BlockSpec((1, 1, Lo), lambda b, t: (b, 0, 0)),)

    kernel = functools.partial(_nlayer_disc_kernel,
                               cfg=cfg, T=T, L=L, Lo=Lo, H_in=H_in)
    outs = pl.pallas_call(
        kernel,
        grid=(B, nt),
        out_shape=out_shapes,
        in_specs=in_specs,
        out_specs=out_specs,
        # Batch axis is embarrassingly parallel (v7x shards it over 2 TCs); the
        # L-tile axis stays "arbitrary" (pooled output block resident along it).
        compiler_params=pltpu.CompilerParams(
            dimension_semantics=("parallel", "arbitrary")),
    )(x_win, e_pad, o_pad, *w_mats, bpack)
    return list(outs[:n]), outs[n]


def discriminator_forward_pallas(x_ncl, params, *, tile_l=None, out_dtype=None):
    """x_ncl: (B, 1, L) like torch. Returns list (per discriminator) of lists of (B, C, L)."""
    results = []
    x = x_ncl                                  # stays NCL end-to-end; no transposes
    for disc in params:
        feats, x = _run_nlayer_disc(x, disc, tile_l=tile_l, out_dtype=out_dtype)
        results.append(feats)
    return results


# ----------------------------------------------------------------------------
# Parameter setup (all packing hoisted to init)
# ----------------------------------------------------------------------------
def expand_grouped(w, groups):
    """Grouped torch weight (Cout, Cin/G, K) -> dense block-diagonal (Cout, Cin, K).

    Init-time only (hoisted out of the forward)."""
    if groups == 1:
        return w
    cout, cig, K = w.shape
    cog = cout // groups
    w_r = w.reshape(groups, cog, cig, K)
    eye = jnp.eye(groups, dtype=w.dtype)
    dense = jnp.einsum("gock,gh->gohck", w_r, eye)
    return dense.reshape(cout, groups * cig, K)


def init_params(key, num_D, ndf, n_layers, downsampling_factor):
    stride = downsampling_factor
    assert stride == 1, "kernel implements the stride-1 (downsampling_factor=1) configuration"
    params = []
    for _ in range(num_D):
        raw = []

        def conv_layer(cin, cout, k, pad, reflect, groups, act):
            nonlocal key
            key, kw, kb = jax.random.split(key, 3)
            # weight_norm(Conv1d) at init has weight == v (g = ||v||); the
            # weights_init normal_(0, 0.02) is overwritten by the WN hook at
            # forward, so drawing v ~ N(0, 0.02) is a faithful deterministic init.
            w = 0.02 * jax.random.normal(kw, (cout, cin // groups, k), jnp.float32)
            b = 0.02 * jax.random.normal(kb, (cout,), jnp.float32)
            return dict(w=w, b=b, pad=pad, reflect=reflect, groups=groups, act=act)

        # layer_0: ReflectionPad1d(7) + Conv1d(1, ndf, 15) + LeakyReLU
        raw.append(conv_layer(1, ndf, 15, 7, True, 1, True))
        nf = ndf
        for _n in range(1, n_layers + 1):
            nf_prev = nf
            nf = min(nf * stride, 1024)
            raw.append(conv_layer(nf_prev, nf, stride * 10 + 1, stride * 5, False,
                                  nf_prev // 4, True))
        nf2 = min(nf * 2, 1024)
        raw.append(conv_layer(nf_prev, nf2, 5, 2, False, 1, True))  # nf_prev, as in the module
        raw.append(conv_layer(nf2, 1, 3, 1, False, 1, False))

        # ---- hoisted kernel-ready packing (done ONCE, not per forward) ----
        n = len(raw)
        cmax = max(l["w"].shape[0] for l in raw)
        cfg, w_mats = [], []
        bias_pack = jnp.zeros((n, cmax, 1), jnp.float32)
        for li, l in enumerate(raw):
            cout, cig, K = l["w"].shape
            cin = cig * l["groups"]
            dense = expand_grouped(l["w"], l["groups"])                   # (cout, cin, K)
            w2 = jnp.transpose(dense, (0, 2, 1)).reshape(cout, K * cin)   # im2col layout
            w_mats.append(w2.astype(jnp.bfloat16))                        # bf16 weights
            bias_pack = bias_pack.at[li, :cout, 0].set(l["b"])
            cfg.append((K, cin, cout, l["pad"], bool(l["act"])))
        params.append(dict(layers=raw, cfg=tuple(cfg), w_mats=w_mats, bias_pack=bias_pack))
    return params


# ----------------------------------------------------------------------------
# Pure-JAX reference (correctness check only)
# ----------------------------------------------------------------------------
def _ref_conv1d(x, w, b, pad, reflect, groups, act):
    mode = "reflect" if reflect else "constant"
    xp = jnp.pad(x, ((0, 0), (0, 0), (pad, pad)), mode=mode)
    y = lax.conv_general_dilated(xp, w, window_strides=(1,), padding=[(0, 0)],
                                 dimension_numbers=("NCH", "OIH", "NCH"),
                                 feature_group_count=groups)
    y = y + b[None, :, None]
    if act:
        y = jnp.where(y >= 0, y, NEG_SLOPE * y)
    return y


def _ref_avgpool(x):
    B, C, L = x.shape
    Lo = (L + 2 - 4) // 2 + 1
    cols = []
    for t in range(Lo):
        lo = max(2 * t - 1, 0)
        hi = min(2 * t + 2, L - 1)
        cols.append(x[:, :, lo:hi + 1].mean(axis=-1))
    return jnp.stack(cols, axis=-1)


def discriminator_forward_ref(x_ncl, params):
    results = []
    x = x_ncl
    for disc in params:
        feats = []
        h = x
        for lyr in disc["layers"]:
            h = _ref_conv1d(h, lyr["w"], lyr["b"], lyr["pad"], lyr["reflect"],
                            lyr["groups"], lyr["act"])
            feats.append(h)
        results.append(feats)
        x = _ref_avgpool(x)
    return results


# ----------------------------------------------------------------------------
if __name__ == "__main__":
    num_D, ndf, n_layers, downsampling_factor = 2, 16, 2, 1
    B, L = 2, 256                                    # L=256, tile=128 -> 2 L-tiles

    key = jax.random.PRNGKey(0)
    key, xk = jax.random.split(key)
    x = jax.random.normal(xk, (B, 1, L), jnp.float32)   # (B, C=1, L) like torch

    params = init_params(key, num_D, ndf, n_layers, downsampling_factor)

    out = discriminator_forward_pallas(x, params, tile_l=128)
    out = jax.block_until_ready(out)

    ref = discriminator_forward_ref(x, params)
    for a, r in zip(jax.tree_util.tree_leaves(out), jax.tree_util.tree_leaves(ref)):
        assert a.shape == r.shape, (a.shape, r.shape)
        # bf16 weights / activations inside the MXU path -> loose-ish tolerance
        np.testing.assert_allclose(np.asarray(a), np.asarray(r), rtol=2e-2, atol=2e-3)

    print("KERNEL_OK")
</pallas_src>

<mosaic_0001>
module attributes {stable_mosaic.version = 11 : i64} {
  func.func @_nlayer_disc_kernel(%arg0: i32, %arg1: i32, %arg2: memref<1x1x168xf32, #tpu.memory_space<vmem>>, %arg3: memref<1x1x130xf32, #tpu.memory_space<vmem>>, %arg4: memref<1x1x130xf32, #tpu.memory_space<vmem>>, %arg5: memref<16x15xbf16, #tpu.memory_space<vmem>>, %arg6: memref<16x176xbf16, #tpu.memory_space<vmem>>, %arg7: memref<16x176xbf16, #tpu.memory_space<vmem>>, %arg8: memref<32x80xbf16, #tpu.memory_space<vmem>>, %arg9: memref<1x96xbf16, #tpu.memory_space<vmem>>, %arg10: memref<5x32x1xf32, #tpu.memory_space<vmem>>, %arg11: memref<1x16x128xf32, #tpu.memory_space<vmem>>, %arg12: memref<1x16x128xf32, #tpu.memory_space<vmem>>, %arg13: memref<1x16x128xf32, #tpu.memory_space<vmem>>, %arg14: memref<1x32x128xf32, #tpu.memory_space<vmem>>, %arg15: memref<1x1x128xf32, #tpu.memory_space<vmem>>, %arg16: memref<1x1x128xf32, #tpu.memory_space<vmem>>) attributes {dimension_semantics = [#tpu.dimension_semantics<parallel>, #tpu.dimension_semantics<arbitrary>], iteration_bounds = array<i64: 2, 2>, scalar_prefetch = 0 : i64, scratch_operands = 0 : i64, tpu.core_type = #tpu.core_type<tc>, window_params = [{transform_indices = @transform_0, window_bounds = array<i64: 1, 1, 168>}, {transform_indices = @transform_1, window_bounds = array<i64: 1, 1, 130>}, {transform_indices = @transform_2, window_bounds = array<i64: 1, 1, 130>}, {pipeline_mode = #tpu.pipeline_mode<synchronous>, transform_indices = @transform_3, window_bounds = array<i64: 16, 15>}, {pipeline_mode = #tpu.pipeline_mode<synchronous>, transform_indices = @transform_4, window_bounds = array<i64: 16, 176>}, {pipeline_mode = #tpu.pipeline_mode<synchronous>, transform_indices = @transform_5, window_bounds = array<i64: 16, 176>}, {pipeline_mode = #tpu.pipeline_mode<synchronous>, transform_indices = @transform_6, window_bounds = array<i64: 32, 80>}, {pipeline_mode = #tpu.pipeline_mode<synchronous>, transform_indices = @transform_7, window_bounds = array<i64: 1, 96>}, {pipeline_mode = #tpu.pipeline_mode<synchronous>, transform_indices = @transform_8, window_bounds = array<i64: 5, 32, 1>}, {transform_indices = @transform_9, window_bounds = array<i64: 1, 16, 128>}, {transform_indices = @transform_10, window_bounds = array<i64: 1, 16, 128>}, {transform_indices = @transform_11, window_bounds = array<i64: 1, 16, 128>}, {transform_indices = @transform_12, window_bounds = array<i64: 1, 32, 128>}, {transform_indices = @transform_13, window_bounds = array<i64: 1, 1, 128>}, {transform_indices = @transform_14, window_bounds = array<i64: 1, 1, 128>}]} {
    %c128_i32 = arith.constant 128 : i32
    %0 = arith.muli %arg1, %c128_i32 : i32
    %c0 = arith.constant 0 : index
    %c0_0 = arith.constant 0 : index
    %c0_1 = arith.constant 0 : index
    %1 = vector.load %arg2[%c0, %c0_0, %c0_1] : memref<1x1x168xf32, #tpu.memory_space<vmem>>, vector<1x1x168xf32>
    %2 = vector.shape_cast %1 : vector<1x1x168xf32> to vector<1x168xf32>
    %c0_2 = arith.constant 0 : index
    %c0_3 = arith.constant 0 : index
    %3 = vector.load %arg5[%c0_2, %c0_3] : memref<16x15xbf16, #tpu.memory_space<vmem>>, vector<16x15xbf16>
    %4 = arith.extf %3 : vector<16x15xbf16> to vector<16x15xf32>
    %cst = arith.constant 0.000000e+00 : f32
    %5 = vector.broadcast %cst : f32 to vector<16x154xf32>
    %6 = vector.extract_strided_slice %4 {offsets = [0, 0], sizes = [16, 1], strides = [1, 1]} : vector<16x15xf32> to vector<16x1xf32>
    %7 = vector.extract_strided_slice %2 {offsets = [0, 0], sizes = [1, 154], strides = [1, 1]} : vector<1x168xf32> to vector<1x154xf32>
    %8 = vector.broadcast %6 : vector<16x1xf32> to vector<16x154xf32>
    %9 = vector.broadcast %7 : vector<1x154xf32> to vector<16x154xf32>
    %10 = arith.mulf %8, %9 : vector<16x154xf32>
    %11 = arith.addf %5, %10 : vector<16x154xf32>
    %12 = vector.extract_strided_slice %4 {offsets = [0, 1], sizes = [16, 1], strides = [1, 1]} : vector<16x15xf32> to vector<16x1xf32>
    %13 = vector.extract_strided_slice %2 {offsets = [0, 1], sizes = [1, 154], strides = [1, 1]} : vector<1x168xf32> to vector<1x154xf32>
    %14 = vector.broadcast %12 : vector<16x1xf32> to vector<16x154xf32>
    %15 = vector.broadcast %13 : vector<1x154xf32> to vector<16x154xf32>
    %16 = arith.mulf %14, %15 : vector<16x154xf32>
    %17 = arith.addf %11, %16 : vector<16x154xf32>
    %18 = vector.extract_strided_slice %4 {offsets = [0, 2], sizes = [16, 1], strides = [1, 1]} : vector<16x15xf32> to vector<16x1xf32>
    %19 = vector.extract_strided_slice %2 {offsets = [0, 2], sizes = [1, 154], strides = [1, 1]} : vector<1x168xf32> to vector<1x154xf32>
    %20 = vector.broadcast %18 : vector<16x1xf32> to vector<16x154xf32>
    %21 = vector.broadcast %19 : vector<1x154xf32> to vector<16x154xf32>
    %22 = arith.mulf %20, %21 : vector<16x154xf32>
    %23 = arith.addf %17, %22 : vector<16x154xf32>
    %24 = vector.extract_strided_slice %4 {offsets = [0, 3], sizes = [16, 1], strides = [1, 1]} : vector<16x15xf32> to vector<16x1xf32>
    %25 = vector.extract_strided_slice %2 {offsets = [0, 3], sizes = [1, 154], strides = [1, 1]} : vector<1x168xf32> to vector<1x154xf32>
    %26 = vector.broadcast %24 : vector<16x1xf32> to vector<16x154xf32>
    %27 = vector.broadcast %25 : vector<1x154xf32> to vector<16x154xf32>
    %28 = arith.mulf %26, %27 : vector<16x154xf32>
    %29 = arith.addf %23, %28 : vector<16x154xf32>
    %30 = vector.extract_strided_slice %4 {offsets = [0, 4], sizes = [16, 1], strides = [1, 1]} : vector<16x15xf32> to vector<16x1xf32>
    %31 = vector.extract_strided_slice %2 {offsets = [0, 4], sizes = [1, 154], strides = [1, 1]} : vector<1x168xf32> to vector<1x154xf32>
    %32 = vector.broadcast %30 : vector<16x1xf32> to vector<16x154xf32>
    %33 = vector.broadcast %31 : vector<1x154xf32> to vector<16x154xf32>
    %34 = arith.mulf %32, %33 : vector<16x154xf32>
    %35 = arith.addf %29, %34 : vector<16x154xf32>
    %36 = vector.extract_strided_slice %4 {offsets = [0, 5], sizes = [16, 1], strides = [1, 1]} : vector<16x15xf32> to vector<16x1xf32>
    %37 = vector.extract_strided_slice %2 {offsets = [0, 5], sizes = [1, 154], strides = [1, 1]} : vector<1x168xf32> to vector<1x154xf32>
    %38 = vector.broadcast %36 : vector<16x1xf32> to vector<16x154xf32>
    %39 = vector.broadcast %37 : vector<1x154xf32> to vector<16x154xf32>
    %40 = arith.mulf %38, %39 : vector<16x154xf32>
    %41 = arith.addf %35, %40 : vector<16x154xf32>
    %42 = vector.extract_strided_slice %4 {offsets = [0, 6], sizes = [16, 1], strides = [1, 1]} : vector<16x15xf32> to vector<16x1xf32>
    %43 = vector.extract_strided_slice %2 {offsets = [0, 6], sizes = [1, 154], strides = [1, 1]} : vector<1x168xf32> to vector<1x154xf32>
    %44 = vector.broadcast %42 : vector<16x1xf32> to vector<16x154xf32>
    %45 = vector.broadcast %43 : vector<1x154xf32> to vector<16x154xf32>
    %46 = arith.mulf %44, %45 : vector<16x154xf32>
    %47 = arith.addf %41, %46 : vector<16x154xf32>
    %48 = vector.extract_strided_slice %4 {offsets = [0, 7], sizes = [16, 1], strides = [1, 1]} : vector<16x15xf32> to vector<16x1xf32>
    %49 = vector.extract_strided_slice %2 {offsets = [0, 7], sizes = [1, 154], strides = [1, 1]} : vector<1x168xf32> to vector<1x154xf32>
    %50 = vector.broadcast %48 : vector<16x1xf32> to vector<16x154xf32>
    %51 = vector.broadcast %49 : vector<1x154xf32> to vector<16x154xf32>
    %52 = arith.mulf %50, %51 : vector<16x154xf32>
    %53 = arith.addf %47, %52 : vector<16x154xf32>
    %54 = vector.extract_strided_slice %4 {offsets = [0, 8], sizes = [16, 1], strides = [1, 1]} : vector<16x15xf32> to vector<16x1xf32>
    %55 = vector.extract_strided_slice %2 {offsets = [0, 8], sizes = [1, 154], strides = [1, 1]} : vector<1x168xf32> to vector<1x154xf32>
    %56 = vector.broadcast %54 : vector<16x1xf32> to vector<16x154xf32>
    %57 = vector.broadcast %55 : vector<1x154xf32> to vector<16x154xf32>
    %58 = arith.mulf %56, %57 : vector<16x154xf32>
    %59 = arith.addf %53, %58 : vector<16x154xf32>
    %60 = vector.extract_strided_slice %4 {offsets = [0, 9], sizes = [16, 1], strides = [1, 1]} : vector<16x15xf32> to vector<16x1xf32>
    %61 = vector.extract_strided_slice %2 {offsets = [0, 9], sizes = [1, 154], strides = [1, 1]} : vector<1x168xf32> to vector<1x154xf32>
    %62 = vector.broadcast %60 : vector<16x1xf32> to vector<16x154xf32>
    %63 = vector.broadcast %61 : vector<1x154xf32> to vector<16x154xf32>
    %64 = arith.mulf %62, %63 : vector<16x154xf32>
    %65 = arith.addf %59, %64 : vector<16x154xf32>
    %66 = vector.extract_strided_slice %4 {offsets = [0, 10], sizes = [16, 1], strides = [1, 1]} : vector<16x15xf32> to vector<16x1xf32>
    %67 = vector.extract_strided_slice %2 {offsets = [0, 10], sizes = [1, 154], strides = [1, 1]} : vector<1x168xf32> to vector<1x154xf32>
    %68 = vector.broadcast %66 : vector<16x1xf32> to vector<16x154xf32>
    %69 = vector.broadcast %67 : vector<1x154xf32> to vector<16x154xf32>
    %70 = arith.mulf %68, %69 : vector<16x154xf32>
    %71 = arith.addf %65, %70 : vector<16x154xf32>
    %72 = vector.extract_strided_slice %4 {offsets = [0, 11], sizes = [16, 1], strides = [1, 1]} : vector<16x15xf32> to vector<16x1xf32>
    %73 = vector.extract_strided_slice %2 {offsets = [0, 11], sizes = [1, 154], strides = [1, 1]} : vector<1x168xf32> to vector<1x154xf32>
    %74 = vector.broadcast %72 : vector<16x1xf32> to vector<16x154xf32>
    %75 = vector.broadcast %73 : vector<1x154xf32> to vector<16x154xf32>
    %76 = arith.mulf %74, %75 : vector<16x154xf32>
    %77 = arith.addf %71, %76 : vector<16x154xf32>
    %78 = vector.extract_strided_slice %4 {offsets = [0, 12], sizes = [16, 1], strides = [1, 1]} : vector<16x15xf32> to vector<16x1xf32>
    %79 = vector.extract_strided_slice %2 {offsets = [0, 12], sizes = [1, 154], strides = [1, 1]} : vector<1x168xf32> to vector<1x154xf32>
    %80 = vector.broadcast %78 : vector<16x1xf32> to vector<16x154xf32>
    %81 = vector.broadcast %79 : vector<1x154xf32> to vector<16x154xf32>
    %82 = arith.mulf %80, %81 : vector<16x154xf32>
    %83 = arith.addf %77, %82 : vector<16x154xf32>
    %84 = vector.extract_strided_slice %4 {offsets = [0, 13], sizes = [16, 1], strides = [1, 1]} : vector<16x15xf32> to vector<16x1xf32>
    %85 = vector.extract_strided_slice %2 {offsets = [0, 13], sizes = [1, 154], strides = [1, 1]} : vector<1x168xf32> to vector<1x154xf32>
    %86 = vector.broadcast %84 : vector<16x1xf32> to vector<16x154xf32>
    %87 = vector.broadcast %85 : vector<1x154xf32> to vector<16x154xf32>
    %88 = arith.mulf %86, %87 : vector<16x154xf32>
    %89 = arith.addf %83, %88 : vector<16x154xf32>
    %90 = vector.extract_strided_slice %4 {offsets = [0, 14], sizes = [16, 1], strides = [1, 1]} : vector<16x15xf32> to vector<16x1xf32>
    %91 = vector.extract_strided_slice %2 {offsets = [0, 14], sizes = [1, 154], strides = [1, 1]} : vector<1x168xf32> to vector<1x154xf32>
    %92 = vector.broadcast %90 : vector<16x1xf32> to vector<16x154xf32>
    %93 = vector.broadcast %91 : vector<1x154xf32> to vector<16x154xf32>
    %94 = arith.mulf %92, %93 : vector<16x154xf32>
    %95 = arith.addf %89, %94 : vector<16x154xf32>
    %c0_4 = arith.constant 0 : index
    %c0_5 = arith.constant 0 : index
    %c0_6 = arith.constant 0 : index
    %96 = vector.load %arg10[%c0_4, %c0_5, %c0_6] : memref<5x32x1xf32, #tpu.memory_space<vmem>>, vector<1x16x1xf32>
    %97 = vector.shape_cast %96 : vector<1x16x1xf32> to vector<16x1xf32>
    %98 = vector.broadcast %97 : vector<16x1xf32> to vector<16x154xf32>
    %99 = arith.addf %95, %98 : vector<16x154xf32>
    %cst_7 = arith.constant 0.000000e+00 : f32
    %100 = vector.broadcast %cst_7 : f32 to vector<16x154xf32>
    %101 = arith.cmpf oge, %99, %100 : vector<16x154xf32>
    %cst_8 = arith.constant 2.000000e-01 : f32
    %102 = vector.broadcast %cst_8 : f32 to vector<16x154xf32>
    %103 = arith.mulf %102, %99 : vector<16x154xf32>
    %104 = arith.select %101, %99, %103 : vector<16x154xi1>, vector<16x154xf32>
    %105 = vector.extract_strided_slice %104 {offsets = [0, 13], sizes = [16, 128], strides = [1, 1]} : vector<16x154xf32> to vector<16x128xf32>
    %c0_9 = arith.constant 0 : index
    %c0_10 = arith.constant 0 : index
    %c0_11 = arith.constant 0 : index
    %106 = vector.load %arg11[%c0_9, %c0_10, %c0_11] : memref<1x16x128xf32, #tpu.memory_space<vmem>>, vector<1x16x128xf32>
    %107 = vector.shape_cast %106 : vector<1x16x128xf32> to vector<16x128xf32>
    %108 = vector.shape_cast %105 : vector<16x128xf32> to vector<1x16x128xf32>
    tpu.vector_store %arg11[%c0_9, %c0_10, %c0_11], %108 {strides = array<i32>} : memref<1x16x128xf32, #tpu.memory_space<vmem>>, vector<1x16x128xf32>,
    %109 = tpu.iota {dimensions = array<i32: 1>} : vector<1x154xi32>
    %c13_i32 = arith.constant 13 : i32
    %110 = arith.subi %0, %c13_i32 : i32
    %111 = vector.broadcast %110 : i32 to vector<1x154xi32>
    %112 = arith.addi %109, %111 : vector<1x154xi32>
    %c0_i32 = arith.constant 0 : i32
    %113 = vector.broadcast %c0_i32 : i32 to vector<1x154xi32>
    %114 = arith.cmpi sge, %112, %113 : vector<1x154xi32>
    %c256_i32 = arith.constant 256 : i32
    %115 = vector.broadcast %c256_i32 : i32 to vector<1x154xi32>
    %116 = arith.cmpi slt, %112, %115 : vector<1x154xi32>
    %117 = arith.andi %114, %116 : vector<1x154xi1>
    %cst_12 = arith.constant 0.000000e+00 : f32
    %118 = vector.shape_cast %117 : vector<1x154xi1> to vector<1x154xi1>
    %119 = vector.broadcast %118 : vector<1x154xi1> to vector<16x154xi1>
    %120 = vector.broadcast %cst_12 : f32 to vector<16x154xf32>
    %121 = arith.select %119, %104, %120 : vector<16x154xi1>, vector<16x154xf32>
    %122 = arith.truncf %121 : vector<16x154xf32> to vector<16x154xbf16>
    %c0_13 = arith.constant 0 : index
    %c0_14 = arith.constant 0 : index
    %123 = vector.load %arg6[%c0_13, %c0_14] : memref<16x176xbf16, #tpu.memory_space<vmem>>, vector<16x176xbf16>
    %124 = vector.extract_strided_slice %122 {offsets = [0, 0], sizes = [16, 144], strides = [1, 1]} : vector<16x154xbf16> to vector<16x144xbf16>
    %125 = vector.extract_strided_slice %122 {offsets = [0, 1], sizes = [16, 144], strides = [1, 1]} : vector<16x154xbf16> to vector<16x144xbf16>
    %126 = vector.extract_strided_slice %122 {offsets = [0, 2], sizes = [16, 144], strides = [1, 1]} : vector<16x154xbf16> to vector<16x144xbf16>
    %127 = vector.extract_strided_slice %122 {offsets = [0, 3], sizes = [16, 144], strides = [1, 1]} : vector<16x154xbf16> to vector<16x144xbf16>
    %128 = vector.extract_strided_slice %122 {offsets = [0, 4], sizes = [16, 144], strides = [1, 1]} : vector<16x154xbf16> to vector<16x144xbf16>
    %129 = vector.extract_strided_slice %122 {offsets = [0, 5], sizes = [16, 144], strides = [1, 1]} : vector<16x154xbf16> to vector<16x144xbf16>
    %130 = vector.extract_strided_slice %122 {offsets = [0, 6], sizes = [16, 144], strides = [1, 1]} : vector<16x154xbf16> to vector<16x144xbf16>
    %131 = vector.extract_strided_slice %122 {offsets = [0, 7], sizes = [16, 144], strides = [1, 1]} : vector<16x154xbf16> to vector<16x144xbf16>
    %132 = vector.extract_strided_slice %122 {offsets = [0, 8], sizes = [16, 144], strides = [1, 1]} : vector<16x154xbf16> to vector<16x144xbf16>
    %133 = vector.extract_strided_slice %122 {offsets = [0, 9], sizes = [16, 144], strides = [1, 1]} : vector<16x154xbf16> to vector<16x144xbf16>
    %134 = vector.extract_strided_slice %122 {offsets = [0, 10], sizes = [16, 144], strides = [1, 1]} : vector<16x154xbf16> to vector<16x144xbf16>
    %135 = tpu.concatenate %124, %125, %126, %127, %128, %129, %130, %131, %132, %133, %134 in 0 : vector<16x144xbf16>, vector<16x144xbf16>, vector<16x144xbf16>, vector<16x144xbf16>, vector<16x144xbf16>, vector<16x144xbf16>, vector<16x144xbf16>, vector<16x144xbf16>, vector<16x144xbf16>, vector<16x144xbf16>, vector<16x144xbf16> -> vector<176x144xbf16>
    %cst_15 = arith.constant dense<0.000000e+00> : vector<16x144xf32>
    %136 = tpu.matmul %123, %135, %cst_15 {dimension_numbers = #tpu.dot_dimension_numbers<[1], [0], [0], [1], [0, 0, 1, 1], [], []>} : vector<16x176xbf16>, vector<176x144xbf16>, vector<16x144xf32> -> vector<16x144xf32>
    %c1 = arith.constant 1 : index
    %c0_16 = arith.constant 0 : index
    %c0_17 = arith.constant 0 : index
    %137 = vector.load %arg10[%c1, %c0_16, %c0_17] : memref<5x32x1xf32, #tpu.memory_space<vmem>>, vector<1x16x1xf32>
    %138 = vector.shape_cast %137 : vector<1x16x1xf32> to vector<16x1xf32>
    %139 = vector.broadcast %138 : vector<16x1xf32> to vector<16x144xf32>
    %140 = arith.addf %136, %139 : vector<16x144xf32>
    %cst_18 = arith.constant 0.000000e+00 : f32
    %141 = vector.broadcast %cst_18 : f32 to vector<16x144xf32>
    %142 = arith.cmpf oge, %140, %141 : vector<16x144xf32>
    %cst_19 = arith.constant 2.000000e-01 : f32
    %143 = vector.broadcast %cst_19 : f32 to vector<16x144xf32>
    %144 = arith.mulf %143, %140 : vector<16x144xf32>
    %145 = arith.select %142, %140, %144 : vector<16x144xi1>, vector<16x144xf32>
    %146 = vector.extract_strided_slice %145 {offsets = [0, 8], sizes = [16, 128], strides = [1, 1]} : vector<16x144xf32> to vector<16x128xf32>
    %c0_20 = arith.constant 0 : index
    %c0_21 = arith.constant 0 : index
    %c0_22 = arith.constant 0 : index
    %147 = vector.load %arg12[%c0_20, %c0_21, %c0_22] : memref<1x16x128xf32, #tpu.memory_space<vmem>>, vector<1x16x128xf32>
    %148 = vector.shape_cast %147 : vector<1x16x128xf32> to vector<16x128xf32>
    %149 = vector.shape_cast %146 : vector<16x128xf32> to vector<1x16x128xf32>
    tpu.vector_store %arg12[%c0_20, %c0_21, %c0_22], %149 {strides = array<i32>} : memref<1x16x128xf32, #tpu.memory_space<vmem>>, vector<1x16x128xf32>,
    %150 = tpu.iota {dimensions = array<i32: 1>} : vector<1x144xi32>
    %c8_i32 = arith.constant 8 : i32
    %151 = arith.subi %0, %c8_i32 : i32
    %152 = vector.broadcast %151 : i32 to vector<1x144xi32>
    %153 = arith.addi %150, %152 : vector<1x144xi32>
    %c0_i32_23 = arith.constant 0 : i32
    %154 = vector.broadcast %c0_i32_23 : i32 to vector<1x144xi32>
    %155 = arith.cmpi sge, %153, %154 : vector<1x144xi32>
    %c256_i32_24 = arith.constant 256 : i32
    %156 = vector.broadcast %c256_i32_24 : i32 to vector<1x144xi32>
    %157 = arith.cmpi slt, %153, %156 : vector<1x144xi32>
    %158 = arith.andi %155, %157 : vector<1x144xi1>
    %cst_25 = arith.constant 0.000000e+00 : f32
    %159 = vector.shape_cast %158 : vector<1x144xi1> to vector<1x144xi1>
    %160 = vector.broadcast %159 : vector<1x144xi1> to vector<16x144xi1>
    %161 = vector.broadcast %cst_25 : f32 to vector<16x144xf32>
    %162 = arith.select %160, %145, %161 : vector<16x144xi1>, vector<16x144xf32>
    %163 = arith.truncf %162 : vector<16x144xf32> to vector<16x144xbf16>
    %c0_26 = arith.constant 0 : index
    %c0_27 = arith.constant 0 : index
    %164 = vector.load %arg7[%c0_26, %c0_27] : memref<16x176xbf16, #tpu.memory_space<vmem>>, vector<16x176xbf16>
    %165 = vector.extract_strided_slice %163 {offsets = [0, 0], sizes = [16, 134], strides = [1, 1]} : vector<16x144xbf16> to vector<16x134xbf16>
    %166 = vector.extract_strided_slice %163 {offsets = [0, 1], sizes = [16, 134], strides = [1, 1]} : vector<16x144xbf16> to vector<16x134xbf16>
    %167 = vector.extract_strided_slice %163 {offsets = [0, 2], sizes = [16, 134], strides = [1, 1]} : vector<16x144xbf16> to vector<16x134xbf16>
    %168 = vector.extract_strided_slice %163 {offsets = [0, 3], sizes = [16, 134], strides = [1, 1]} : vector<16x144xbf16> to vector<16x134xbf16>
    %169 = vector.extract_strided_slice %163 {offsets = [0, 4], sizes = [16, 134], strides = [1, 1]} : vector<16x144xbf16> to vector<16x134xbf16>
    %170 = vector.extract_strided_slice %163 {offsets = [0, 5], sizes = [16, 134], strides = [1, 1]} : vector<16x144xbf16> to vector<16x134xbf16>
    %171 = vector.extract_strided_slice %163 {offsets = [0, 6], sizes = [16, 134], strides = [1, 1]} : vector<16x144xbf16> to vector<16x134xbf16>
    %172 = vector.extract_strided_slice %163 {offsets = [0, 7], sizes = [16, 134], strides = [1, 1]} : vector<16x144xbf16> to vector<16x134xbf16>
    %173 = vector.extract_strided_slice %163 {offsets = [0, 8], sizes = [16, 134], strides = [1, 1]} : vector<16x144xbf16> to vector<16x134xbf16>
    %174 = vector.extract_strided_slice %163 {offsets = [0, 9], sizes = [16, 134], strides = [1, 1]} : vector<16x144xbf16> to vector<16x134xbf16>
    %175 = vector.extract_strided_slice %163 {offsets = [0, 10], sizes = [16, 134], strides = [1, 1]} : vector<16x144xbf16> to vector<16x134xbf16>
    %176 = tpu.concatenate %165, %166, %167, %168, %169, %170, %171, %172, %173, %174, %175 in 0 : vector<16x134xbf16>, vector<16x134xbf16>, vector<16x134xbf16>, vector<16x134xbf16>, vector<16x134xbf16>, vector<16x134xbf16>, vector<16x134xbf16>, vector<16x134xbf16>, vector<16x134xbf16>, vector<16x134xbf16>, vector<16x134xbf16> -> vector<176x134xbf16>
    %cst_28 = arith.constant dense<0.000000e+00> : vector<16x134xf32>
    %177 = tpu.matmul %164, %176, %cst_28 {dimension_numbers = #tpu.dot_dimension_numbers<[1], [0], [0], [1], [0, 0, 1, 1], [], []>} : vector<16x176xbf16>, vector<176x134xbf16>, vector<16x134xf32> -> vector<16x134xf32>
    %c2 = arith.constant 2 : index
    %c0_29 = arith.constant 0 : index
    %c0_30 = arith.constant 0 : index
    %178 = vector.load %arg10[%c2, %c0_29, %c0_30] : memref<5x32x1xf32, #tpu.memory_space<vmem>>, vector<1x16x1xf32>
    %179 = vector.shape_cast %178 : vector<1x16x1xf32> to vector<16x1xf32>
    %180 = vector.broadcast %179 : vector<16x1xf32> to vector<16x134xf32>
    %181 = arith.addf %177, %180 : vector<16x134xf32>
    %cst_31 = arith.constant 0.000000e+00 : f32
    %182 = vector.broadcast %cst_31 : f32 to vector<16x134xf32>
    %183 = arith.cmpf oge, %181, %182 : vector<16x134xf32>
    %cst_32 = arith.constant 2.000000e-01 : f32
    %184 = vector.broadcast %cst_32 : f32 to vector<16x134xf32>
    %185 = arith.mulf %184, %181 : vector<16x134xf32>
    %186 = arith.select %183, %181, %185 : vector<16x134xi1>, vector<16x134xf32>
    %187 = vector.extract_strided_slice %186 {offsets = [0, 3], sizes = [16, 128], strides = [1, 1]} : vector<16x134xf32> to vector<16x128xf32>
    %c0_33 = arith.constant 0 : index
    %c0_34 = arith.constant 0 : index
    %c0_35 = arith.constant 0 : index
    %188 = vector.load %arg13[%c0_33, %c0_34, %c0_35] : memref<1x16x128xf32, #tpu.memory_space<vmem>>, vector<1x16x128xf32>
    %189 = vector.shape_cast %188 : vector<1x16x128xf32> to vector<16x128xf32>
    %190 = vector.shape_cast %187 : vector<16x128xf32> to vector<1x16x128xf32>
    tpu.vector_store %arg13[%c0_33, %c0_34, %c0_35], %190 {strides = array<i32>} : memref<1x16x128xf32, #tpu.memory_space<vmem>>, vector<1x16x128xf32>,
    %191 = tpu.iota {dimensions = array<i32: 1>} : vector<1x134xi32>
    %c3_i32 = arith.constant 3 : i32
    %192 = arith.subi %0, %c3_i32 : i32
    %193 = vector.broadcast %192 : i32 to vector<1x134xi32>
    %194 = arith.addi %191, %193 : vector<1x134xi32>
    %c0_i32_36 = arith.constant 0 : i32
    %195 = vector.broadcast %c0_i32_36 : i32 to vector<1x134xi32>
    %196 = arith.cmpi sge, %194, %195 : vector<1x134xi32>
    %c256_i32_37 = arith.constant 256 : i32
    %197 = vector.broadcast %c256_i32_37 : i32 to vector<1x134xi32>
    %198 = arith.cmpi slt, %194, %197 : vector<1x134xi32>
    %199 = arith.andi %196, %198 : vector<1x134xi1>
    %cst_38 = arith.constant 0.000000e+00 : f32
    %200 = vector.shape_cast %199 : vector<1x134xi1> to vector<1x134xi1>
    %201 = vector.broadcast %200 : vector<1x134xi1> to vector<16x134xi1>
    %202 = vector.broadcast %cst_38 : f32 to vector<16x134xf32>
    %203 = arith.select %201, %186, %202 : vector<16x134xi1>, vector<16x134xf32>
    %204 = arith.truncf %203 : vector<16x134xf32> to vector<16x134xbf16>
    %c0_39 = arith.constant 0 : index
    %c0_40 = arith.constant 0 : index
    %205 = vector.load %arg8[%c0_39, %c0_40] : memref<32x80xbf16, #tpu.memory_space<vmem>>, vector<32x80xbf16>
    %206 = vector.extract_strided_slice %204 {offsets = [0, 0], sizes = [16, 130], strides = [1, 1]} : vector<16x134xbf16> to vector<16x130xbf16>
    %207 = vector.extract_strided_slice %204 {offsets = [0, 1], sizes = [16, 130], strides = [1, 1]} : vector<16x134xbf16> to vector<16x130xbf16>
    %208 = vector.extract_strided_slice %204 {offsets = [0, 2], sizes = [16, 130], strides = [1, 1]} : vector<16x134xbf16> to vector<16x130xbf16>
    %209 = vector.extract_strided_slice %204 {offsets = [0, 3], sizes = [16, 130], strides = [1, 1]} : vector<16x134xbf16> to vector<16x130xbf16>
    %210 = vector.extract_strided_slice %204 {offsets = [0, 4], sizes = [16, 130], strides = [1, 1]} : vector<16x134xbf16> to vector<16x130xbf16>
    %211 = tpu.concatenate %206, %207, %208, %209, %210 in 0 : vector<16x130xbf16>, vector<16x130xbf16>, vector<16x130xbf16>, vector<16x130xbf16>, vector<16x130xbf16> -> vector<80x130xbf16>
    %cst_41 = arith.constant dense<0.000000e+00> : vector<32x130xf32>
    %212 = tpu.matmul %205, %211, %cst_41 {dimension_numbers = #tpu.dot_dimension_numbers<[1], [0], [0], [1], [0, 0, 1, 1], [], []>} : vector<32x80xbf16>, vector<80x130xbf16>, vector<32x130xf32> -> vector<32x130xf32>
    %c3 = arith.constant 3 : index
    %c0_42 = arith.constant 0 : index
    %c0_43 = arith.constant 0 : index
    %213 = vector.load %arg10[%c3, %c0_42, %c0_43] : memref<5x32x1xf32, #tpu.memory_space<vmem>>, vector<1x32x1xf32>
    %214 = vector.shape_cast %213 : vector<1x32x1xf32> to vector<32x1xf32>
    %215 = vector.broadcast %214 : vector<32x1xf32> to vector<32x130xf32>
    %216 = arith.addf %212, %215 : vector<32x130xf32>
    %cst_44 = arith.constant 0.000000e+00 : f32
    %217 = vector.broadcast %cst_44 : f32 to vector<32x130xf32>
    %218 = arith.cmpf oge, %216, %217 : vector<32x130xf32>
    %cst_45 = arith.constant 2.000000e-01 : f32
    %219 = vector.broadcast %cst_45 : f32 to vector<32x130xf32>
    %220 = arith.mulf %219, %216 : vector<32x130xf32>
    %221 = arith.select %218, %216, %220 : vector<32x130xi1>, vector<32x130xf32>
    %222 = vector.extract_strided_slice %221 {offsets = [0, 1], sizes = [32, 128], strides = [1, 1]} : vector<32x130xf32> to vector<32x128xf32>
    %c0_46 = arith.constant 0 : index
    %c0_47 = arith.constant 0 : index
    %c0_48 = arith.constant 0 : index
    %223 = vector.load %arg14[%c0_46, %c0_47, %c0_48] : memref<1x32x128xf32, #tpu.memory_space<vmem>>, vector<1x32x128xf32>
    %224 = vector.shape_cast %223 : vector<1x32x128xf32> to vector<32x128xf32>
    %225 = vector.shape_cast %222 : vector<32x128xf32> to vector<1x32x128xf32>
    tpu.vector_store %arg14[%c0_46, %c0_47, %c0_48], %225 {strides = array<i32>} : memref<1x32x128xf32, #tpu.memory_space<vmem>>, vector<1x32x128xf32>,
    %226 = tpu.iota {dimensions = array<i32: 1>} : vector<1x130xi32>
    %c1_i32 = arith.constant 1 : i32
    %227 = arith.subi %0, %c1_i32 : i32
    %228 = vector.broadcast %227 : i32 to vector<1x130xi32>
    %229 = arith.addi %226, %228 : vector<1x130xi32>
    %c0_i32_49 = arith.constant 0 : i32
    %230 = vector.broadcast %c0_i32_49 : i32 to vector<1x130xi32>
    %231 = arith.cmpi sge, %229, %230 : vector<1x130xi32>
    %c256_i32_50 = arith.constant 256 : i32
    %232 = vector.broadcast %c256_i32_50 : i32 to vector<1x130xi32>
    %233 = arith.cmpi slt, %229, %232 : vector<1x130xi32>
    %234 = arith.andi %231, %233 : vector<1x130xi1>
    %cst_51 = arith.constant 0.000000e+00 : f32
    %235 = vector.shape_cast %234 : vector<1x130xi1> to vector<1x130xi1>
    %236 = vector.broadcast %235 : vector<1x130xi1> to vector<32x130xi1>
    %237 = vector.broadcast %cst_51 : f32 to vector<32x130xf32>
    %238 = arith.select %236, %221, %237 : vector<32x130xi1>, vector<32x130xf32>
    %239 = arith.truncf %238 : vector<32x130xf32> to vector<32x130xbf16>
    %c0_52 = arith.constant 0 : index
    %c0_53 = arith.constant 0 : index
    %240 = vector.load %arg9[%c0_52, %c0_53] : memref<1x96xbf16, #tpu.memory_space<vmem>>, vector<1x96xbf16>
    %241 = vector.extract_strided_slice %239 {offsets = [0, 0], sizes = [32, 128], strides = [1, 1]} : vector<32x130xbf16> to vector<32x128xbf16>
    %242 = vector.extract_strided_slice %239 {offsets = [0, 1], sizes = [32, 128], strides = [1, 1]} : vector<32x130xbf16> to vector<32x128xbf16>
    %243 = vector.extract_strided_slice %239 {offsets = [0, 2], sizes = [32, 128], strides = [1, 1]} : vector<32x130xbf16> to vector<32x128xbf16>
    %244 = tpu.concatenate %241, %242, %243 in 0 : vector<32x128xbf16>, vector<32x128xbf16>, vector<32x128xbf16> -> vector<96x128xbf16>
    %cst_54 = arith.constant dense<0.000000e+00> : vector<1x128xf32>
    %245 = tpu.matmul %240, %244, %cst_54 {dimension_numbers = #tpu.dot_dimension_numbers<[1], [0], [0], [1], [0, 0, 1, 1], [], []>} : vector<1x96xbf16>, vector<96x128xbf16>, vector<1x128xf32> -> vector<1x128xf32>
    %c4 = arith.constant 4 : index
    %c0_55 = arith.constant 0 : index
    %c0_56 = arith.constant 0 : index
    %246 = vector.load %arg10[%c4, %c0_55, %c0_56] : memref<5x32x1xf32, #tpu.memory_space<vmem>>, vector<1x1x1xf32>
    %247 = vector.shape_cast %246 : vector<1x1x1xf32> to vector<1x1xf32>
    %248 = vector.broadcast %247 : vector<1x1xf32> to vector<1x128xf32>
    %249 = arith.addf %245, %248 : vector<1x128xf32>
    %c0_57 = arith.constant 0 : index
    %c0_58 = arith.constant 0 : index
    %c0_59 = arith.constant 0 : index
    %250 = vector.load %arg15[%c0_57, %c0_58, %c0_59] : memref<1x1x128xf32, #tpu.memory_space<vmem>>, vector<1x1x128xf32>
    %251 = vector.shape_cast %250 : vector<1x1x128xf32> to vector<1x128xf32>
    %252 = vector.shape_cast %249 : vector<1x128xf32> to vector<1x1x128xf32>
    tpu.vector_store %arg15[%c0_57, %c0_58, %c0_59], %252 {strides = array<i32>} : memref<1x1x128xf32, #tpu.memory_space<vmem>>, vector<1x1x128xf32>,
    %c0_i32_60 = arith.constant 0 : i32
    %253 = arith.cmpi eq, %arg1, %c0_i32_60 : i32
    %254 = arith.extui %253 : i1 to i32
    %c0_i32_61 = arith.constant 0 : i32
    %255 = arith.cmpi ne, %254, %c0_i32_61 : i32
    scf.if %255 {
      %c0_62 = arith.constant 0 : index
      %c0_63 = arith.constant 0 : index
      %c0_64 = arith.constant 0 : index
      %256 = vector.load %arg3[%c0_62, %c0_63, %c0_64] : memref<1x1x130xf32, #tpu.memory_space<vmem>>, vector<1x1x130xf32>
      %257 = vector.shape_cast %256 : vector<1x1x130xf32> to vector<1x130xf32>
      %c0_65 = arith.constant 0 : index
      %c0_66 = arith.constant 0 : index
      %c0_67 = arith.constant 0 : index
      %258 = vector.load %arg4[%c0_65, %c0_66, %c0_67] : memref<1x1x130xf32, #tpu.memory_space<vmem>>, vector<1x1x130xf32>
      %259 = vector.shape_cast %258 : vector<1x1x130xf32> to vector<1x130xf32>
      %260 = vector.extract_strided_slice %259 {offsets = [0, 0], sizes = [1, 128], strides = [1, 1]} : vector<1x130xf32> to vector<1x128xf32>
      %261 = vector.extract_strided_slice %257 {offsets = [0, 1], sizes = [1, 128], strides = [1, 1]} : vector<1x130xf32> to vector<1x128xf32>
      %262 = arith.addf %260, %261 : vector<1x128xf32>
      %263 = vector.extract_strided_slice %259 {offsets = [0, 1], sizes = [1, 128], strides = [1, 1]} : vector<1x130xf32> to vector<1x128xf32>
      %264 = arith.addf %262, %263 : vector<1x128xf32>
      %265 = vector.extract_strided_slice %257 {offsets = [0, 2], sizes = [1, 128], strides = [1, 1]} : vector<1x130xf32> to vector<1x128xf32>
      %266 = arith.addf %264, %265 : vector<1x128xf32>
      %267 = tpu.iota {dimensions = array<i32: 1>} : vector<1x128xi32>
      %c0_i32_68 = arith.constant 0 : i32
      %268 = vector.broadcast %c0_i32_68 : i32 to vector<1x128xi32>
      %269 = arith.cmpi eq, %267, %268 : vector<1x128xi32>
      %c127_i32 = arith.constant 127 : i32
      %270 = vector.broadcast %c127_i32 : i32 to vector<1x128xi32>
      %271 = arith.cmpi eq, %267, %270 : vector<1x128xi32>
      %272 = arith.ori %269, %271 : vector<1x128xi1>
      %cst_69 = arith.constant 0.333333343 : f32
      %cst_70 = arith.constant 2.500000e-01 : f32
      %273 = vector.broadcast %cst_69 : f32 to vector<1x128xf32>
      %274 = vector.broadcast %cst_70 : f32 to vector<1x128xf32>
      %275 = arith.select %272, %273, %274 : vector<1x128xi1>, vector<1x128xf32>
      %276 = arith.mulf %266, %275 : vector<1x128xf32>
      %c0_71 = arith.constant 0 : index
      %c0_72 = arith.constant 0 : index
      %c0_73 = arith.constant 0 : index
      %277 = vector.load %arg16[%c0_71, %c0_72, %c0_73] : memref<1x1x128xf32, #tpu.memory_space<vmem>>, vector<1x1x128xf32>
      %278 = vector.shape_cast %277 : vector<1x1x128xf32> to vector<1x128xf32>
      %279 = vector.shape_cast %276 : vector<1x128xf32> to vector<1x1x128xf32>
      tpu.vector_store %arg16[%c0_71, %c0_72, %c0_73], %279 {strides = array<i32>} : memref<1x1x128xf32, #tpu.memory_space<vmem>>, vector<1x1x128xf32>,
    } else {
    }
    return
  }
  func.func @transform_0(%arg0: i32, %arg1: i32) -> (i32, i32, i32) {
    %c2_i32 = arith.constant 2 : i32
    %0 = arith.muli %arg0, %c2_i32 : i32
    %1 = arith.addi %0, %arg1 : i32
    %c0_i32 = arith.constant 0 : i32
    %c0_i32_0 = arith.constant 0 : i32
    %c0_i32_1 = arith.constant 0 : i32
    return %1, %c0_i32, %c0_i32_0 : i32, i32, i32
  }
  func.func @transform_1(%arg0: i32, %arg1: i32) -> (i32, i32, i32) {
    %c0_i32 = arith.constant 0 : i32
    %c0_i32_0 = arith.constant 0 : i32
    %c0_i32_1 = arith.constant 0 : i32
    return %arg0, %c0_i32, %c0_i32_0 : i32, i32, i32
  }
  func.func @transform_2(%arg0: i32, %arg1: i32) -> (i32, i32, i32) {
    %c0_i32 = arith.constant 0 : i32
    %c0_i32_0 = arith.constant 0 : i32
    %c0_i32_1 = arith.constant 0 : i32
    return %arg0, %c0_i32, %c0_i32_0 : i32, i32, i32
  }
  func.func @transform_3(%arg0: i32, %arg1: i32) -> (i32, i32) {
    %c0_i32 = arith.constant 0 : i32
    %c0_i32_0 = arith.constant 0 : i32
    %c0_i32_1 = arith.constant 0 : i32
    return %c0_i32, %c0_i32_0 : i32, i32
  }
  func.func @transform_4(%arg0: i32, %arg1: i32) -> (i32, i32) {
    %c0_i32 = arith.constant 0 : i32
    %c0_i32_0 = arith.constant 0 : i32
    %c0_i32_1 = arith.constant 0 : i32
    return %c0_i32, %c0_i32_0 : i32, i32
  }
  func.func @transform_5(%arg0: i32, %arg1: i32) -> (i32, i32) {
    %c0_i32 = arith.constant 0 : i32
    %c0_i32_0 = arith.constant 0 : i32
    %c0_i32_1 = arith.constant 0 : i32
    return %c0_i32, %c0_i32_0 : i32, i32
  }
  func.func @transform_6(%arg0: i32, %arg1: i32) -> (i32, i32) {
    %c0_i32 = arith.constant 0 : i32
    %c0_i32_0 = arith.constant 0 : i32
    %c0_i32_1 = arith.constant 0 : i32
    return %c0_i32, %c0_i32_0 : i32, i32
  }
  func.func @transform_7(%arg0: i32, %arg1: i32) -> (i32, i32) {
    %c0_i32 = arith.constant 0 : i32
    %c0_i32_0 = arith.constant 0 : i32
    %c0_i32_1 = arith.constant 0 : i32
    return %c0_i32, %c0_i32_0 : i32, i32
  }
  func.func @transform_8(%arg0: i32, %arg1: i32) -> (i32, i32, i32) {
    %c0_i32 = arith.constant 0 : i32
    %c0_i32_0 = arith.constant 0 : i32
    %c0_i32_1 = arith.constant 0 : i32
    %c0_i32_2 = arith.constant 0 : i32
    return %c0_i32, %c0_i32_0, %c0_i32_1 : i32, i32, i32
  }
  func.func @transform_9(%arg0: i32, %arg1: i32) -> (i32, i32, i32) {
    %c0_i32 = arith.constant 0 : i32
    %c0_i32_0 = arith.constant 0 : i32
    return %arg0, %c0_i32, %arg1 : i32, i32, i32
  }
  func.func @transform_10(%arg0: i32, %arg1: i32) -> (i32, i32, i32) {
    %c0_i32 = arith.constant 0 : i32
    %c0_i32_0 = arith.constant 0 : i32
    return %arg0, %c0_i32, %arg1 : i32, i32, i32
  }
  func.func @transform_11(%arg0: i32, %arg1: i32) -> (i32, i32, i32) {
    %c0_i32 = arith.constant 0 : i32
    %c0_i32_0 = arith.constant 0 : i32
    return %arg0, %c0_i32, %arg1 : i32, i32, i32
  }
  func.func @transform_12(%arg0: i32, %arg1: i32) -> (i32, i32, i32) {
    %c0_i32 = arith.constant 0 : i32
    %c0_i32_0 = arith.constant 0 : i32
    return %arg0, %c0_i32, %arg1 : i32, i32, i32
  }
  func.func @transform_13(%arg0: i32, %arg1: i32) -> (i32, i32, i32) {
    %c0_i32 = arith.constant 0 : i32
    %c0_i32_0 = arith.constant 0 : i32
    return %arg0, %c0_i32, %arg1 : i32, i32, i32
  }
  func.func @transform_14(%arg0: i32, %arg1: i32) -> (i32, i32, i32) {
    %c0_i32 = arith.constant 0 : i32
    %c0_i32_0 = arith.constant 0 : i32
    %c0_i32_1 = arith.constant 0 : i32
    return %arg0, %c0_i32, %c0_i32_0 : i32, i32, i32
  }
}

</mosaic_0001>

<llo_original>
// kernel: tpu_custom_call.1
$region0: #{tpu_custom_call.1}
  #allocation0 [shape = 'u32[]', space=smem, size = 0x4, offset = 0x4, fixed_abs, tag = 'smem constant byte address 0x4 - core index']
  #allocation1 [shape = 'u32[144,128]{1,0:T(1,128)}', space=vmem, size = 0x12000, scoped, tag = 'internal scratch']
  %s0 = inlined_call_operand.vmem [shape: f32[4,1,168], index: 0, kind: input, shape index: {}]
  %s1 = inlined_call_operand.vmem [shape: f32[2,1,130], index: 1, kind: input, shape index: {}]
  %s2 = inlined_call_operand.vmem [shape: f32[2,1,130], index: 2, kind: input, shape index: {}]
  %s3 = inlined_call_operand.vmem [shape: bf16[16,15], index: 3, kind: input, shape index: {}]
  %s4 = inlined_call_operand.vmem [shape: bf16[16,176], index: 4, kind: input, shape index: {}]
  %s5 = inlined_call_operand.vmem [shape: bf16[16,176], index: 5, kind: input, shape index: {}]
  %s6 = inlined_call_operand.vmem [shape: bf16[32,80], index: 6, kind: input, shape index: {}]
  %s7 = inlined_call_operand.vmem [shape: bf16[1,96], index: 7, kind: input, shape index: {}]
  %s8 = inlined_call_operand.vmem [shape: f32[5,32,1], index: 8, kind: input, shape index: {}]
  %s9 = inlined_call_operand.hbm [shape: f32[2,16,256], index: 9, kind: output, shape index: {0}]
  %s10 = inlined_call_operand.hbm [shape: f32[2,16,256], index: 10, kind: output, shape index: {1}]
  %s11 = inlined_call_operand.hbm [shape: f32[2,16,256], index: 11, kind: output, shape index: {2}]
  %s12 = inlined_call_operand.hbm [shape: f32[2,32,256], index: 12, kind: output, shape index: {3}]
  %s13 = inlined_call_operand.hbm [shape: f32[2,1,256], index: 13, kind: output, shape index: {4}]
  %s14 = inlined_call_operand.hbm [shape: f32[2,1,128], index: 14, kind: output, shape index: {5}]
  %15 = xla_tuple %s9, %s10, %s11, %s12, %s13, %s14
  %s16 = sld [smem:[#allocation0]]
  $region113: #{tpu_custom_call.1} parent=0
    _
  %s18 = ssub.s32 1, %s16
  %s19 = scalar_select 0, %s18, %s16
  $region1: #{tpu_custom_call.1} parent=0
    #allocation2 [shape = 'u8[16384]{0}', space=vmem, size = 0x4000, scoped, tag = 'output window, operand 0']
    #allocation3 [shape = 's32[2]{0}', space=sflag, size = 0x8, scoped, tag = 'scoped memory for tpu_custom_call.1']
    #allocation4 [shape = 'u8[16384]{0}', space=vmem, size = 0x4000, scoped, tag = 'output window, operand 1']
    #allocation5 [shape = 's32[2]{0}', space=sflag, size = 0x8, scoped, tag = 'scoped memory for tpu_custom_call.1']
    #allocation6 [shape = 'u8[16384]{0}', space=vmem, size = 0x4000, scoped, tag = 'output window, operand 2']
    #allocation7 [shape = 'u8[32768]{0}', space=vmem, size = 0x8000, scoped, tag = 'output window, operand 3']
    #allocation8 [shape = 's32[2]{0}', space=sflag, size = 0x8, scoped, tag = 'scoped memory for tpu_custom_call.1']
    #allocation9 [shape = 'u8[1024]{0}', space=vmem, size = 0x400, scoped, tag = 'output window, operand 4']
    #allocation10 [shape = 'u8[1024]{0}', space=vmem, size = 0x400, scoped, tag = 'output window, operand 5']
    #allocation11 [shape = 's32[2]{0}', space=sflag, size = 0x8, scoped, tag = 'scoped memory for tpu_custom_call.1']
    %20 = vsyncpa [#allocation3], 0
    %s21 = scalar_lea.sflag [#allocation3], 1
    %22 = vsyncpa %s21, 0
    %23 = vsyncpa [#allocation5], 0
    %s24 = scalar_lea.sflag [#allocation5], 1
    %25 = vsyncpa %s24, 0
    %26 = vsyncpa [#allocation8], 0
    %s27 = scalar_lea.sflag [#allocation8], 1
    %28 = vsyncpa %s27, 0
    %29 = vsyncpa [#allocation11], 0
    %s30 = scalar_lea.sflag [#allocation11], 1
    %31 = vsyncpa %s30, 0
    loop: start=0, step=1, limit=6
    $region2: #{tpu_custom_call.1} parent=1 // loop_pre_header
      _
    $region3: #{tpu_custom_call.1} parent=1 // loop_header
      %s33 = sphi 0, %s37
      %p34 = scmp.ge.s32.totalorder %s33, 6
      %s40 = sphi 0, %s52
      %s41 = sphi 0, %s48
      %s42 = sphi 0, %s40
      %s43 = sphi 0, %s41
      %s44 = sphi 0, %s42
      %s45 = sphi 0, %s43
      %s59 = sphi 0, %s61
      %s62 = sphi 0, %s59
      %s63 = sphi 0, %s62
      %s79 = sphi 0, %s63
      %s85 = sphi 0, %s87
      %s88 = sphi 0, %s85
      %s89 = sphi 0, %s88
      %s105 = sphi 0, %s89
      %s111 = sphi 0, %s113
      %s114 = sphi 0, %s111
      %s115 = sphi 0, %s114
      %s131 = sphi 0, %s115
      %s135 = sphi 0, %s135
      %s137 = sphi 0, %s135
      %s138 = sphi 0, %s137
      %s152 = sphi 0, %s138
      %s156 = sphi 0, %s156
      %s158 = sphi 0, %s156
      %s159 = sphi 0, %s158
      %s173 = sphi 0, %s159
      %s177 = sphi 0, %s177
      %s179 = sphi 0, %s177
      %s180 = sphi 0, %s179
      %s194 = sphi 0, %s180
      %s198 = sphi 0, %s198
      %s200 = sphi 0, %s198
      %s201 = sphi 0, %s200
      %s215 = sphi 0, %s201
      %s219 = sphi 0, %s219
      %s221 = sphi 0, %s219
      %s222 = sphi 0, %s221
      %s236 = sphi 0, %s222
      %s240 = sphi 0, %s240
      %s242 = sphi 0, %s240
      %s243 = sphi 0, %s242
      %s257 = sphi 0, %s243
      %s265 = sphi 0, %s267
      %s268 = sphi 0, %s265
      %s269 = sphi 0, %s268
      %s285 = sphi 0, %s269
      %s293 = sphi 0, %s295
      %s296 = sphi 0, %s293
      %s297 = sphi 0, %s296
      %s313 = sphi 0, %s297
      %s321 = sphi 0, %s323
      %s324 = sphi 0, %s321
      %s325 = sphi 0, %s324
      %s341 = sphi 0, %s325
      %s349 = sphi 0, %s351
      %s352 = sphi 0, %s349
      %s353 = sphi 0, %s352
      %s369 = sphi 0, %s353
      %s377 = sphi 0, %s379
      %s380 = sphi 0, %s377
      %s381 = sphi 0, %s380
      %s397 = sphi 0, %s381
      %s403 = sphi 0, %s405
      %s406 = sphi 0, %s403
      %s407 = sphi 0, %s406
      %s423 = sphi 0, %s407
    $region4: #{tpu_custom_call.1} parent=1 // loop_header_branch
      %36 = sbr.rel (%p34) target = $region8
    $region5: #{tpu_custom_call.1} parent=1 // loop_body
      %s38 = ssub.s32 %s33, 1
      %s39 = ssub.s32 %s33, 2
      %s46 = sadd.s32 1, %s41
      %p47 = scmp.ge.s32.totalorder %s46, 2
      %s48 = scalar_select %p47, 0, %s46
      %s49 = sadd.s32 1, %s40
      %s50 = scalar_select %p47, %s49, %s40
      %p51 = scmp.ge.s32.totalorder %s50, 2
      %s52 = scalar_select %p51, 0, %s50
      %s53 = smul.u32 %s40, 2
      %s54 = sadd.s32 %s53, %s41
      %s55 = smul.u32 %s52, 2
      %s56 = sadd.s32 %s55, %s48
      %s57 = ssub.s32 %s54, %s56
      %p58 = scmp.eq.s32.totalorder %s57, 0
      %s60 = sadd.s32 %s59, 1
      %s61 = scalar_select %p58, %s59, %s60
      %p64 = pneg %p58
      %p65 = scmp.eq.s32.totalorder %s33, 3
      %p66 = por %p64, %p65
      %p67 = scmp.ne.s32.totalorder %s59, %s62
      %p68 = scmp.eq.s32.totalorder %s33, 0
      %p69 = por %p67, %p68
      %p70 = scmp.ne.s32.totalorder %s59, %s62
      %p71 = scmp.eq.s32.totalorder %s38, 3
      %p72 = por %p70, %p71
      %p73 = scmp.ne.s32.totalorder %s62, %s63
      %p74 = scmp.eq.s32.totalorder %s38, 0
      %p75 = por %p73, %p74
      %p76 = scmp.ne.s32.totalorder %s62, %s63
      %p77 = scmp.eq.s32.totalorder %s39, 3
      %p78 = por %p76, %p77
      %p80 = scmp.ne.s32.totalorder %s63, %s79
      %p81 = scmp.eq.s32.totalorder %s39, 0
      %p82 = por %p80, %p81
      %s83 = ssub.s32 %s40, %s52
      %p84 = scmp.eq.s32.totalorder %s83, 0
      %s86 = sadd.s32 %s85, 1
      %s87 = scalar_select %p84, %s85, %s86
      %p90 = pneg %p84
      %p91 = scmp.eq.s32.totalorder %s33, 3
      %p92 = por %p90, %p91
      %p93 = scmp.ne.s32.totalorder %s85, %s88
      %p94 = scmp.eq.s32.totalorder %s33, 0
      %p95 = por %p93, %p94
      %p96 = scmp.ne.s32.totalorder %s85, %s88
      %p97 = scmp.eq.s32.totalorder %s38, 3
      %p98 = por %p96, %p97
      %p99 = scmp.ne.s32.totalorder %s88, %s89
      %p100 = scmp.eq.s32.totalorder %s38, 0
      %p101 = por %p99, %p100
      %p102 = scmp.ne.s32.totalorder %s88, %s89
      %p103 = scmp.eq.s32.totalorder %s39, 3
      %p104 = por %p102, %p103
      %p106 = scmp.ne.s32.totalorder %s89, %s105
      %p107 = scmp.eq.s32.totalorder %s39, 0
      %p108 = por %p106, %p107
      %s109 = ssub.s32 %s40, %s52
      %p110 = scmp.eq.s32.totalorder %s109, 0
      %s112 = sadd.s32 %s111, 1
      %s113 = scalar_select %p110, %s111, %s112
      %p116 = pneg %p110
      %p117 = scmp.eq.s32.totalorder %s33, 3
      %p118 = por %p116, %p117
      %p119 = scmp.ne.s32.totalorder %s111, %s114
      %p120 = scmp.eq.s32.totalorder %s33, 0
      %p121 = por %p119, %p120
      %p122 = scmp.ne.s32.totalorder %s111, %s114
      %p123 = scmp.eq.s32.totalorder %s38, 3
      %p124 = por %p122, %p123
      %p125 = scmp.ne.s32.totalorder %s114, %s115
      %p126 = scmp.eq.s32.totalorder %s38, 0
      %p127 = por %p125, %p126
      %p128 = scmp.ne.s32.totalorder %s114, %s115
      %p129 = scmp.eq.s32.totalorder %s39, 3
      %p130 = por %p128, %p129
      %p132 = scmp.ne.s32.totalorder %s115, %s131
      %p133 = scmp.eq.s32.totalorder %s39, 0
      %p134 = por %p132, %p133
      %s136 = sadd.s32 %s135, 1
      %p139 = scmp.eq.s32.totalorder %s33, 3
      %p140 = scmp.ne.s32.totalorder %s135, %s137
      %p141 = scmp.eq.s32.totalorder %s33, 0
      %p142 = por %p140, %p141
      %p143 = scmp.ne.s32.totalorder %s135, %s137
      %p144 = scmp.eq.s32.totalorder %s38, 3
      %p145 = por %p143, %p144
      %p146 = scmp.ne.s32.totalorder %s137, %s138
      %p147 = scmp.eq.s32.totalorder %s38, 0
      %p148 = por %p146, %p147
      %p149 = scmp.ne.s32.totalorder %s137, %s138
      %p150 = scmp.eq.s32.totalorder %s39, 3
      %p151 = por %p149, %p150
      %p153 = scmp.ne.s32.totalorder %s138, %s152
      %p154 = scmp.eq.s32.totalorder %s39, 0
      %p155 = por %p153, %p154
      %s157 = sadd.s32 %s156, 1
      %p160 = scmp.eq.s32.totalorder %s33, 3
      %p161 = scmp.ne.s32.totalorder %s156, %s158
      %p162 = scmp.eq.s32.totalorder %s33, 0
      %p163 = por %p161, %p162
      %p164 = scmp.ne.s32.totalorder %s156, %s158
      %p165 = scmp.eq.s32.totalorder %s38, 3
      %p166 = por %p164, %p165
      %p167 = scmp.ne.s32.totalorder %s158, %s159
      %p168 = scmp.eq.s32.totalorder %s38, 0
      %p169 = por %p167, %p168
      %p170 = scmp.ne.s32.totalorder %s158, %s159
      %p171 = scmp.eq.s32.totalorder %s39, 3
      %p172 = por %p170, %p171
      %p174 = scmp.ne.s32.totalorder %s159, %s173
      %p175 = scmp.eq.s32.totalorder %s39, 0
      %p176 = por %p174, %p175
      %s178 = sadd.s32 %s177, 1
      %p181 = scmp.eq.s32.totalorder %s33, 3
      %p182 = scmp.ne.s32.totalorder %s177, %s179
      %p183 = scmp.eq.s32.totalorder %s33, 0
      %p184 = por %p182, %p183
      %p185 = scmp.ne.s32.totalorder %s177, %s179
      %p186 = scmp.eq.s32.totalorder %s38, 3
      %p187 = por %p185, %p186
      %p188 = scmp.ne.s32.totalorder %s179, %s180
      %p189 = scmp.eq.s32.totalorder %s38, 0
      %p190 = por %p188, %p189
      %p191 = scmp.ne.s32.totalorder %s179, %s180
      %p192 = scmp.eq.s32.totalorder %s39, 3
      %p193 = por %p191, %p192
      %p195 = scmp.ne.s32.totalorder %s180, %s194
      %p196 = scmp.eq.s32.totalorder %s39, 0
      %p197 = por %p195, %p196
      %s199 = sadd.s32 %s198, 1
      %p202 = scmp.eq.s32.totalorder %s33, 3
      %p203 = scmp.ne.s32.totalorder %s198, %s200
      %p204 = scmp.eq.s32.totalorder %s33, 0
      %p205 = por %p203, %p204
      %p206 = scmp.ne.s32.totalorder %s198, %s200
      %p207 = scmp.eq.s32.totalorder %s38, 3
      %p208 = por %p206, %p207
      %p209 = scmp.ne.s32.totalorder %s200, %s201
      %p210 = scmp.eq.s32.totalorder %s38, 0
      %p211 = por %p209, %p210
      %p212 = scmp.ne.s32.totalorder %s200, %s201
      %p213 = scmp.eq.s32.totalorder %s39, 3
      %p214 = por %p212, %p213
      %p216 = scmp.ne.s32.totalorder %s201, %s215
      %p217 = scmp.eq.s32.totalorder %s39, 0
      %p218 = por %p216, %p217
      %s220 = sadd.s32 %s219, 1
      %p223 = scmp.eq.s32.totalorder %s33, 3
      %p224 = scmp.ne.s32.totalorder %s219, %s221
      %p225 = scmp.eq.s32.totalorder %s33, 0
      %p226 = por %p224, %p225
      %p227 = scmp.ne.s32.totalorder %s219, %s221
      %p228 = scmp.eq.s32.totalorder %s38, 3
      %p229 = por %p227, %p228
      %p230 = scmp.ne.s32.totalorder %s221, %s222
      %p231 = scmp.eq.s32.totalorder %s38, 0
      %p232 = por %p230, %p231
      %p233 = scmp.ne.s32.totalorder %s221, %s222
      %p234 = scmp.eq.s32.totalorder %s39, 3
      %p235 = por %p233, %p234
      %p237 = scmp.ne.s32.totalorder %s222, %s236
      %p238 = scmp.eq.s32.totalorder %s39, 0
      %p239 = por %p237, %p238
      %s241 = sadd.s32 %s240, 1
      %p244 = scmp.eq.s32.totalorder %s33, 3
      %p245 = scmp.ne.s32.totalorder %s240, %s242
      %p246 = scmp.eq.s32.totalorder %s33, 0
      %p247 = por %p245, %p246
      %p248 = scmp.ne.s32.totalorder %s240, %s242
      %p249 = scmp.eq.s32.totalorder %s38, 3
      %p250 = por %p248, %p249
      %p251 = scmp.ne.s32.totalorder %s242, %s243
      %p252 = scmp.eq.s32.totalorder %s38, 0
      %p253 = por %p251, %p252
      %p254 = scmp.ne.s32.totalorder %s242, %s243
      %p255 = scmp.eq.s32.totalorder %s39, 3
      %p256 = por %p254, %p255
      %p258 = scmp.ne.s32.totalorder %s243, %s257
      %p259 = scmp.eq.s32.totalorder %s39, 0
      %p260 = por %p258, %p259
      %s261 = ssub.s32 %s40, %s52
      %s262 = ssub.s32 %s41, %s48
      %s263 = sor.u32 %s261, %s262
      %p264 = scmp.eq.s32.totalorder %s263, 0
      %s266 = sadd.s32 %s265, 1
      %s267 = scalar_select %p264, %s265, %s266
      %p270 = pneg %p264
      %p271 = scmp.eq.s32.totalorder %s33, 3
      %p272 = por %p270, %p271
      %p273 = scmp.ne.s32.totalorder %s265, %s268
      %p274 = scmp.eq.s32.totalorder %s33, 0
      %p275 = por %p273, %p274
      %p276 = scmp.ne.s32.totalorder %s265, %s268
      %p277 = scmp.eq.s32.totalorder %s38, 3
      %p278 = por %p276, %p277
      %p279 = scmp.ne.s32.totalorder %s268, %s269
      %p280 = scmp.eq.s32.totalorder %s38, 0
      %p281 = por %p279, %p280
      %p282 = scmp.ne.s32.totalorder %s268, %s269
      %p283 = scmp.eq.s32.totalorder %s39, 3
      %p284 = por %p282, %p283
      %p286 = scmp.ne.s32.totalorder %s269, %s285
      %p287 = scmp.eq.s32.totalorder %s39, 0
      %p288 = por %p286, %p287
      %s289 = ssub.s32 %s40, %s52
      %s290 = ssub.s32 %s41, %s48
      %s291 = sor.u32 %s289, %s290
      %p292 = scmp.eq.s32.totalorder %s291, 0
      %s294 = sadd.s32 %s293, 1
      %s295 = scalar_select %p292, %s293, %s294
      %p298 = pneg %p292
      %p299 = scmp.eq.s32.totalorder %s33, 3
      %p300 = por %p298, %p299
      %p301 = scmp.ne.s32.totalorder %s293, %s296
      %p302 = scmp.eq.s32.totalorder %s33, 0
      %p303 = por %p301, %p302
      %p304 = scmp.ne.s32.totalorder %s293, %s296
      %p305 = scmp.eq.s32.totalorder %s38, 3
      %p306 = por %p304, %p305
      %p307 = scmp.ne.s32.totalorder %s296, %s297
      %p308 = scmp.eq.s32.totalorder %s38, 0
      %p309 = por %p307, %p308
      %p310 = scmp.ne.s32.totalorder %s296, %s297
      %p311 = scmp.eq.s32.totalorder %s39, 3
      %p312 = por %p310, %p311
      %p314 = scmp.ne.s32.totalorder %s297, %s313
      %p315 = scmp.eq.s32.totalorder %s39, 0
      %p316 = por %p314, %p315
      %s317 = ssub.s32 %s40, %s52
      %s318 = ssub.s32 %s41, %s48
      %s319 = sor.u32 %s317, %s318
      %p320 = scmp.eq.s32.totalorder %s319, 0
      %s322 = sadd.s32 %s321, 1
      %s323 = scalar_select %p320, %s321, %s322
      %p326 = pneg %p320
      %p327 = scmp.eq.s32.totalorder %s33, 3
      %p328 = por %p326, %p327
      %p329 = scmp.ne.s32.totalorder %s321, %s324
      %p330 = scmp.eq.s32.totalorder %s33, 0
      %p331 = por %p329, %p330
      %p332 = scmp.ne.s32.totalorder %s321, %s324
      %p333 = scmp.eq.s32.totalorder %s38, 3
      %p334 = por %p332, %p333
      %p335 = scmp.ne.s32.totalorder %s324, %s325
      %p336 = scmp.eq.s32.totalorder %s38, 0
      %p337 = por %p335, %p336
      %p338 = scmp.ne.s32.totalorder %s324, %s325
      %p339 = scmp.eq.s32.totalorder %s39, 3
      %p340 = por %p338, %p339
      %p342 = scmp.ne.s32.totalorder %s325, %s341
      %p343 = scmp.eq.s32.totalorder %s39, 0
      %p344 = por %p342, %p343
      %s345 = ssub.s32 %s40, %s52
      %s346 = ssub.s32 %s41, %s48
      %s347 = sor.u32 %s345, %s346
      %p348 = scmp.eq.s32.totalorder %s347, 0
      %s350 = sadd.s32 %s349, 1
      %s351 = scalar_select %p348, %s349, %s350
      %p354 = pneg %p348
      %p355 = scmp.eq.s32.totalorder %s33, 3
      %p356 = por %p354, %p355
      %p357 = scmp.ne.s32.totalorder %s349, %s352
      %p358 = scmp.eq.s32.totalorder %s33, 0
      %p359 = por %p357, %p358
      %p360 = scmp.ne.s32.totalorder %s349, %s352
      %p361 = scmp.eq.s32.totalorder %s38, 3
      %p362 = por %p360, %p361
      %p363 = scmp.ne.s32.totalorder %s352, %s353
      %p364 = scmp.eq.s32.totalorder %s38, 0
      %p365 = por %p363, %p364
      %p366 = scmp.ne.s32.totalorder %s352, %s353
      %p367 = scmp.eq.s32.totalorder %s39, 3
      %p368 = por %p366, %p367
      %p370 = scmp.ne.s32.totalorder %s353, %s369
      %p371 = scmp.eq.s32.totalorder %s39, 0
      %p372 = por %p370, %p371
      %s373 = ssub.s32 %s40, %s52
      %s374 = ssub.s32 %s41, %s48
      %s375 = sor.u32 %s373, %s374
      %p376 = scmp.eq.s32.totalorder %s375, 0
      %s378 = sadd.s32 %s377, 1
      %s379 = scalar_select %p376, %s377, %s378
      %p382 = pneg %p376
      %p383 = scmp.eq.s32.totalorder %s33, 3
      %p384 = por %p382, %p383
      %p385 = scmp.ne.s32.totalorder %s377, %s380
      %p386 = scmp.eq.s32.totalorder %s33, 0
      %p387 = por %p385, %p386
      %p388 = scmp.ne.s32.totalorder %s377, %s380
      %p389 = scmp.eq.s32.totalorder %s38, 3
      %p390 = por %p388, %p389
      %p391 = scmp.ne.s32.totalorder %s380, %s381
      %p392 = scmp.eq.s32.totalorder %s38, 0
      %p393 = por %p391, %p392
      %p394 = scmp.ne.s32.totalorder %s380, %s381
      %p395 = scmp.eq.s32.totalorder %s39, 3
      %p396 = por %p394, %p395
      %p398 = scmp.ne.s32.totalorder %s381, %s397
      %p399 = scmp.eq.s32.totalorder %s39, 0
      %p400 = por %p398, %p399
      %s401 = ssub.s32 %s40, %s52
      %p402 = scmp.eq.s32.totalorder %s401, 0
      %s404 = sadd.s32 %s403, 1
      %s405 = scalar_select %p402, %s403, %s404
      %p408 = pneg %p402
      %p409 = scmp.eq.s32.totalorder %s33, 3
      %p410 = por %p408, %p409
      %p411 = scmp.ne.s32.totalorder %s403, %s406
      %p412 = scmp.eq.s32.totalorder %s33, 0
      %p413 = por %p411, %p412
      %p414 = scmp.ne.s32.totalorder %s403, %s406
      %p415 = scmp.eq.s32.totalorder %s38, 3
      %p416 = por %p414, %p415
      %p417 = scmp.ne.s32.totalorder %s406, %s407
      %p418 = scmp.eq.s32.totalorder %s38, 0
      %p419 = por %p417, %p418
      %p420 = scmp.ne.s32.totalorder %s406, %s407
      %p421 = scmp.eq.s32.totalorder %s39, 3
      %p422 = por %p420, %p421
      %p424 = scmp.ne.s32.totalorder %s407, %s423
      %p425 = scmp.eq.s32.totalorder %s39, 0
      %p426 = por %p424, %p425
      %p427 = scmp.le.s32.totalorder 1, %s33
      %p428 = scmp.lt.s32.totalorder %s33, 5
      %p429 = pnand %p427, %p428
      %p430 = pneg %p429
      // Predicated region
      $region9: #{tpu_custom_call.1} parent=5 // pred_check
        _
      $region10: #{tpu_custom_call.1} parent=5 // pred_check_branch
        %432 = sbr.rel (%p429) target = $region12
      $region11: #{tpu_custom_call.1} parent=5 // pred_region
        %s433 = ssub.s32 %s33, 1
        // Predicated region
        $region13: #{tpu_custom_call.1} parent=11 // pred_check
          %p434 = pneg %p148
        $region14: #{tpu_custom_call.1} parent=11 // pred_check_branch
          %436 = sbr.rel (%p434) target = $region16
        $region15: #{tpu_custom_call.1} parent=11 // pred_region
          _
        $region16: #{tpu_custom_call.1} parent=11 // pred_fallthru
          _
        // Predicated region
        $region17: #{tpu_custom_call.1} parent=11 // pred_check
          %p437 = pneg %p169
        $region18: #{tpu_custom_call.1} parent=11 // pred_check_branch
          %439 = sbr.rel (%p437) target = $region20
        $region19: #{tpu_custom_call.1} parent=11 // pred_region
          _
        $region20: #{tpu_custom_call.1} parent=11 // pred_fallthru
          _
        // Predicated region
        $region21: #{tpu_custom_call.1} parent=11 // pred_check
          %p440 = pneg %p190
        $region22: #{tpu_custom_call.1} parent=11 // pred_check_branch
          %442 = sbr.rel (%p440) target = $region24
        $region23: #{tpu_custom_call.1} parent=11 // pred_region
          _
        $region24: #{tpu_custom_call.1} parent=11 // pred_fallthru
          _
        // Predicated region
        $region25: #{tpu_custom_call.1} parent=11 // pred_check
          %p443 = pneg %p211
        $region26: #{tpu_custom_call.1} parent=11 // pred_check_branch
          %445 = sbr.rel (%p443) target = $region28
        $region27: #{tpu_custom_call.1} parent=11 // pred_region
          _
        $region28: #{tpu_custom_call.1} parent=11 // pred_fallthru
          _
        // Predicated region
        $region29: #{tpu_custom_call.1} parent=11 // pred_check
          %p446 = pneg %p232
        $region30: #{tpu_custom_call.1} parent=11 // pred_check_branch
          %448 = sbr.rel (%p446) target = $region32
        $region31: #{tpu_custom_call.1} parent=11 // pred_region
          _
        $region32: #{tpu_custom_call.1} parent=11 // pred_fallthru
          _
        // Predicated region
        $region33: #{tpu_custom_call.1} parent=11 // pred_check
          %p449 = pneg %p253
        $region34: #{tpu_custom_call.1} parent=11 // pred_check_branch
          %451 = sbr.rel (%p449) target = $region36
        $region35: #{tpu_custom_call.1} parent=11 // pred_region
          _
        $region36: #{tpu_custom_call.1} parent=11 // pred_fallthru
          _
      $region12: #{tpu_custom_call.1} parent=5 // pred_fallthru
        _
      %p452 = scmp.lt.s32.totalorder %s33, 4
      // Predicated region
      $region37: #{tpu_custom_call.1} parent=5 // pred_check
        %p453 = pneg %p452
      $region38: #{tpu_custom_call.1} parent=5 // pred_check_branch
        %455 = sbr.rel (%p453) target = $region40
      $region39: #{tpu_custom_call.1} parent=5 // pred_region
        // Predicated region
        $region41: #{tpu_custom_call.1} parent=39 // pred_check
          %p456 = pneg %p69
        $region42: #{tpu_custom_call.1} parent=39 // pred_check_branch
          %458 = sbr.rel (%p456) target = $region44
        $region43: #{tpu_custom_call.1} parent=39 // pred_region
          %s459 = smul.u32 %s40, 2
          %s460 = sadd.s32 %s459, %s41
          %p461 = scmp.lt.s32.totalorder %s460, 3
          %s462 = scalar_select %p461, %s460, 3
          %s463 = smul.addr %s462, 2
          %s464 = scalar_lea.vmem %s0, %s463
          %s465 = smul.u32 %s40, 2
          %s466 = sadd.s32 %s465, %s41
        $region44: #{tpu_custom_call.1} parent=39 // pred_fallthru
          _
        // Predicated region
        $region45: #{tpu_custom_call.1} parent=39 // pred_check
          %p467 = pneg %p95
        $region46: #{tpu_custom_call.1} parent=39 // pred_check_branch
          %469 = sbr.rel (%p467) target = $region48
        $region47: #{tpu_custom_call.1} parent=39 // pred_region
          %p470 = scmp.lt.s32.totalorder %s40, 1
          %s471 = scalar_select %p470, %s40, 1
          %s472 = smul.addr %s471, 2
          %s473 = scalar_lea.vmem %s1, %s472
        $region48: #{tpu_custom_call.1} parent=39 // pred_fallthru
          _
        // Predicated region
        $region49: #{tpu_custom_call.1} parent=39 // pred_check
          %p474 = pneg %p121
        $region50: #{tpu_custom_call.1} parent=39 // pred_check_branch
          %476 = sbr.rel (%p474) target = $region52
        $region51: #{tpu_custom_call.1} parent=39 // pred_region
          %p477 = scmp.lt.s32.totalorder %s40, 1
          %s478 = scalar_select %p477, %s40, 1
          %s479 = smul.addr %s478, 2
          %s480 = scalar_lea.vmem %s2, %s479
        $region52: #{tpu_custom_call.1} parent=39 // pred_fallthru
          _
      $region40: #{tpu_custom_call.1} parent=5 // pred_fallthru
        _
      %p481 = scmp.le.s32.totalorder 1, %s33
      %p482 = scmp.lt.s32.totalorder %s33, 5
      %p483 = pnand %p481, %p482
      %p484 = pneg %p483
      // Predicated region
      $region53: #{tpu_custom_call.1} parent=5 // pred_check
        _
      $region54: #{tpu_custom_call.1} parent=5 // pred_check_branch
        %486 = sbr.rel (%p483) target = $region56
      $region55: #{tpu_custom_call.1} parent=5 // pred_region
        %s487 = ssub.s32 %s33, 1
        %s488 = smul.u32 %s42, 2
        %s489 = sadd.s32 %s488, %s43
        %p490 = scmp.lt.s32.totalorder %s489, 3
        %s491 = scalar_select %p490, %s489, 3
        %s492 = smul.addr %s491, 2
        %s493 = scalar_lea.vmem %s0, %s492
        %p494 = pneg %p75
        %p495 = pneg %p72
        %p496 = scmp.lt.s32.totalorder %s42, 1
        %s497 = scalar_select %p496, %s42, 1
        %s498 = smul.addr %s497, 2
        %s499 = scalar_lea.vmem %s1, %s498
        %p500 = pneg %p101
        %p501 = pneg %p98
        %p502 = scmp.lt.s32.totalorder %s42, 1
        %s503 = scalar_select %p502, %s42, 1
        %s504 = smul.addr %s503, 2
        %s505 = scalar_lea.vmem %s2, %s504
        %p506 = pneg %p127
        %p507 = pneg %p124
        %p508 = pneg %p148
        %p509 = pneg %p145
        %p510 = pneg %p169
        %p511 = pneg %p166
        %p512 = pneg %p190
        %p513 = pneg %p187
        %p514 = pneg %p211
        %p515 = pneg %p208
        %p516 = pneg %p232
        %p517 = pneg %p229
        %p518 = pneg %p253
        %p519 = pneg %p250
        %p520 = pneg %p281
        %p521 = pneg %p278
        %s522 = sand.u32 %s268, 1
        %s523 = scalar_lea.sflag [#allocation3], %s522
        %s524 = sand.u32 %s268, 1
        %s525 = smul.addr %s524, 16
        %s526 = scalar_lea.vmem [#allocation2], %s525
        %p527 = pneg %p309
        %p528 = pneg %p306
        %s529 = sand.u32 %s38, 1
        %s530 = scalar_lea.sflag [#allocation5], %s529
        %s531 = sand.u32 %s296, 1
        %s532 = smul.addr %s531, 16
        %s533 = scalar_lea.vmem [#allocation4], %s532
        %p534 = pneg %p337
        %p535 = pneg %p334
        %s536 = sand.u32 %s38, 1
        %s537 = scalar_lea.sflag [#allocation5], %s536
        %s538 = sand.u32 %s324, 1
        %s539 = smul.addr %s538, 16
        %s540 = scalar_lea.vmem [#allocation6], %s539
        %p541 = pneg %p365
        %p542 = pneg %p362
        %s543 = sand.u32 %s38, 1
        %s544 = scalar_lea.sflag [#allocation8], %s543
        %s545 = sand.u32 %s352, 1
        %s546 = smul.addr %s545, 32
        %s547 = scalar_lea.vmem [#allocation7], %s546
        %p548 = pneg %p393
        %p549 = pneg %p390
        %s550 = sand.u32 %s38, 1
        %s551 = scalar_lea.sflag [#allocation8], %s550
        %s552 = sand.u32 %s380, 1
        %s553 = scalar_lea.vmem [#allocation9], %s552
        %p554 = pneg %p419
        %p555 = pneg %p416
        %s556 = sand.u32 %s406, 1
        %s557 = scalar_lea.sflag [#allocation11], %s556
        %s558 = sand.u32 %s406, 1
        %s559 = scalar_lea.vmem [#allocation10], %s558
        %s560 = smul.u32 %s42, 2
        %s561 = sadd.s32 %s560, %s43
        %p562 = scmp.lt.s32.totalorder %s561, 3
        %s563 = scalar_select %p562, %s561, 3
        %s564 = smul.addr %s563, 2
        %s565 = scalar_lea.vmem %s0, %s564
        %s566 = smul.u32 %s42, 2
        %s567 = sadd.s32 %s566, %s43
        %p568 = scmp.lt.s32.totalorder %s42, 1
        %s569 = scalar_select %p568, %s42, 1
        %s570 = smul.addr %s569, 2
        %s571 = scalar_lea.vmem %s1, %s570
        %p572 = scmp.lt.s32.totalorder %s42, 1
        %s573 = scalar_select %p572, %s42, 1
        %s574 = smul.addr %s573, 2
        %s575 = scalar_lea.vmem %s2, %s574
        %s577 = smul.u32 %s43, 128
        %v578 = vld [vmem:[%s565] sm:$0x3]
        %v579 = vld [vmem:[%s3] sm:$0xf]
        %v580 = vld [vmem:[%s3 + $0x4] sm:$0xf]
        %v581 = vunpack.c.l.bf16 %v579
        %v582 = vunpack.c.l.bf16 %v580
        %584 = vset.pattern.permute.xlu0 0
        %585 = vperm.xlu0 %584, %v581
        %v586 = vpop.permute.xlu0 %585
        %589 = vset.pattern.permute.xlu0 0
        %590 = vperm.xlu0 %589, %v582
        %v591 = vpop.permute.xlu0 %590
        %v594 = vlaneseq
        %v595 = vshrl.u32 %v594, 7
        %v596 = vsub.s32 0, %v595
        %v597 = vrot.slane %v578, %v596
        %v598 = vlaneseq
        %v599 = vshrl.u32 %v598, 7
        %v600 = vsub.s32 1, %v599
        %v601 = vrot.slane %v578, %v600
        %v604 = vmul.f32 %v586, %v597
        %v605 = vmul.f32 %v586, %v601
        %v606 = vmul.f32 %v591, %v597
        %v607 = vmul.f32 %v591, %v601
        %v608 = vadd.f32 %v604, 0.0
        %v609 = vadd.f32 %v605, 0.0
        %v610 = vadd.f32 %v606, 0.0
        %v611 = vadd.f32 %v607, 0.0
        %612 = vset.pattern.permute.xlu0 1
        %613 = vperm.xlu0 %612, %v581
        %v614 = vpop.permute.xlu0 %613
        %616 = vset.pattern.permute.xlu0 1
        %617 = vperm.xlu0 %616, %v582
        %v618 = vpop.permute.xlu0 %617
        %v620 = vmul.f32 %v614, %v597
        %v621 = vmul.f32 %v614, %v601
        %v622 = vmul.f32 %v618, %v597
        %v623 = vmul.f32 %v618, %v601
        %628 = vrot.lane.b32.xlu0 %v620, 127
        %v629 = vpop.permute.xlu0 %628
        %630 = vrot.lane.b32.xlu0 %v621, 127
        %v631 = vpop.permute.xlu0 %630
        %632 = vrot.lane.b32.xlu0 %v622, 127
        %v633 = vpop.permute.xlu0 %632
        %634 = vrot.lane.b32.xlu0 %v623, 127
        %v635 = vpop.permute.xlu0 %634
        %vm636 = vcmask 1039360
        %v637 = vsel %vm636, %v629, %v631
        %v638 = vsel %vm636, %v633, %v635
        %v643 = vadd.f32 %v608, %v637
        %v644 = vadd.f32 %v609, %v631
        %v645 = vadd.f32 %v610, %v638
        %v646 = vadd.f32 %v611, %v635
        %647 = vset.pattern.permute.xlu0 2
        %648 = vperm.xlu0 %647, %v581
        %v649 = vpop.permute.xlu0 %648
        %651 = vset.pattern.permute.xlu0 2
        %652 = vperm.xlu0 %651, %v582
        %v653 = vpop.permute.xlu0 %652
        %v655 = vmul.f32 %v649, %v597
        %v656 = vmul.f32 %v649, %v601
        %v657 = vmul.f32 %v653, %v597
        %v658 = vmul.f32 %v653, %v601
        %663 = vrot.lane.b32.xlu0 %v655, 126
        %v664 = vpop.permute.xlu0 %663
        %665 = vrot.lane.b32.xlu0 %v656, 126
        %v666 = vpop.permute.xlu0 %665
        %667 = vrot.lane.b32.xlu0 %v657, 126
        %v668 = vpop.permute.xlu0 %667
        %669 = vrot.lane.b32.xlu0 %v658, 126
        %v670 = vpop.permute.xlu0 %669
        %vm671 = vcmask 1031168
        %v672 = vsel %vm671, %v664, %v666
        %v673 = vsel %vm671, %v668, %v670
        %v678 = vadd.f32 %v643, %v672
        %v679 = vadd.f32 %v644, %v666
        %v680 = vadd.f32 %v645, %v673
        %v681 = vadd.f32 %v646, %v670
        %682 = vset.pattern.permute.xlu0 3
        %683 = vperm.xlu0 %682, %v581
        %v684 = vpop.permute.xlu0 %683
        %686 = vset.pattern.permute.xlu0 3
        %687 = vperm.xlu0 %686, %v582
        %v688 = vpop.permute.xlu0 %687
        %v690 = vmul.f32 %v684, %v597
        %v691 = vmul.f32 %v684, %v601
        %v692 = vmul.f32 %v688, %v597
        %v693 = vmul.f32 %v688, %v601
        %698 = vrot.lane.b32.xlu0 %v690, 125
        %v699 = vpop.permute.xlu0 %698
        %700 = vrot.lane.b32.xlu0 %v691, 125
        %v701 = vpop.permute.xlu0 %700
        %702 = vrot.lane.b32.xlu0 %v692, 125
        %v703 = vpop.permute.xlu0 %702
        %704 = vrot.lane.b32.xlu0 %v693, 125
        %v705 = vpop.permute.xlu0 %704
        %vm706 = vcmask 1022976
        %v707 = vsel %vm706, %v699, %v701
        %v708 = vsel %vm706, %v703, %v705
        %v713 = vadd.f32 %v678, %v707
        %v714 = vadd.f32 %v679, %v701
        %v715 = vadd.f32 %v680, %v708
        %v716 = vadd.f32 %v681, %v705
        %717 = vset.pattern.permute.xlu0 4
        %718 = vperm.xlu0 %717, %v581
        %v719 = vpop.permute.xlu0 %718
        %721 = vset.pattern.permute.xlu0 4
        %722 = vperm.xlu0 %721, %v582
        %v723 = vpop.permute.xlu0 %722
        %v725 = vmul.f32 %v719, %v597
        %v726 = vmul.f32 %v719, %v601
        %v727 = vmul.f32 %v723, %v597
        %v728 = vmul.f32 %v723, %v601
        %733 = vrot.lane.b32.xlu0 %v725, 124
        %v734 = vpop.permute.xlu0 %733
        %735 = vrot.lane.b32.xlu0 %v726, 124
        %v736 = vpop.permute.xlu0 %735
        %737 = vrot.lane.b32.xlu0 %v727, 124
        %v738 = vpop.permute.xlu0 %737
        %739 = vrot.lane.b32.xlu0 %v728, 124
        %v740 = vpop.permute.xlu0 %739
        %vm741 = vcmask 1014784
        %v742 = vsel %vm741, %v734, %v736
        %v743 = vsel %vm741, %v738, %v740
        %v748 = vadd.f32 %v713, %v742
        %v749 = vadd.f32 %v714, %v736
        %v750 = vadd.f32 %v715, %v743
        %v751 = vadd.f32 %v716, %v740
        %752 = vset.pattern.permute.xlu0 5
        %753 = vperm.xlu0 %752, %v581
        %v754 = vpop.permute.xlu0 %753
        %756 = vset.pattern.permute.xlu0 5
        %757 = vperm.xlu0 %756, %v582
        %v758 = vpop.permute.xlu0 %757
        %v760 = vmul.f32 %v754, %v597
        %v761 = vmul.f32 %v754, %v601
        %v762 = vmul.f32 %v758, %v597
        %v763 = vmul.f32 %v758, %v601
        %768 = vrot.lane.b32.xlu0 %v760, 123
        %v769 = vpop.permute.xlu0 %768
        %770 = vrot.lane.b32.xlu0 %v761, 123
        %v771 = vpop.permute.xlu0 %770
        %772 = vrot.lane.b32.xlu0 %v762, 123
        %v773 = vpop.permute.xlu0 %772
        %774 = vrot.lane.b32.xlu0 %v763, 123
        %v775 = vpop.permute.xlu0 %774
        %vm776 = vcmask 1006592
        %v777 = vsel %vm776, %v769, %v771
        %v778 = vsel %vm776, %v773, %v775
        %v783 = vadd.f32 %v748, %v777
        %v784 = vadd.f32 %v749, %v771
        %v785 = vadd.f32 %v750, %v778
        %v786 = vadd.f32 %v751, %v775
        %787 = vset.pattern.permute.xlu0 6
        %788 = vperm.xlu0 %787, %v581
        %v789 = vpop.permute.xlu0 %788
        %791 = vset.pattern.permute.xlu0 6
        %792 = vperm.xlu0 %791, %v582
        %v793 = vpop.permute.xlu0 %792
        %v795 = vmul.f32 %v789, %v597
        %v796 = vmul.f32 %v789, %v601
        %v797 = vmul.f32 %v793, %v597
        %v798 = vmul.f32 %v793, %v601
        %803 = vrot.lane.b32.xlu0 %v795, 122
        %v804 = vpop.permute.xlu0 %803
        %805 = vrot.lane.b32.xlu0 %v796, 122
        %v806 = vpop.permute.xlu0 %805
        %807 = vrot.lane.b32.xlu0 %v797, 122
        %v808 = vpop.permute.xlu0 %807
        %809 = vrot.lane.b32.xlu0 %v798, 122
        %v810 = vpop.permute.xlu0 %809
        %vm811 = vcmask 998400
        %v812 = vsel %vm811, %v804, %v806
        %v813 = vsel %vm811, %v808, %v810
        %v818 = vadd.f32 %v783, %v812
        %v819 = vadd.f32 %v784, %v806
        %v820 = vadd.f32 %v785, %v813
        %v821 = vadd.f32 %v786, %v810
        %822 = vset.pattern.permute.xlu0 7
        %823 = vperm.xlu0 %822, %v581
        %v824 = vpop.permute.xlu0 %823
        %826 = vset.pattern.permute.xlu0 7
        %827 = vperm.xlu0 %826, %v582
        %v828 = vpop.permute.xlu0 %827
        %v830 = vmul.f32 %v824, %v597
        %v831 = vmul.f32 %v824, %v601
        %v832 = vmul.f32 %v828, %v597
        %v833 = vmul.f32 %v828, %v601
        %838 = vrot.lane.b32.xlu0 %v830, 121
        %v839 = vpop.permute.xlu0 %838
        %840 = vrot.lane.b32.xlu0 %v831, 121
        %v841 = vpop.permute.xlu0 %840
        %842 = vrot.lane.b32.xlu0 %v832, 121
        %v843 = vpop.permute.xlu0 %842
        %844 = vrot.lane.b32.xlu0 %v833, 121
        %v845 = vpop.permute.xlu0 %844
        %vm846 = vcmask 990208
        %v847 = vsel %vm846, %v839, %v841
        %v848 = vsel %vm846, %v843, %v845
        %v853 = vadd.f32 %v818, %v847
        %v854 = vadd.f32 %v819, %v841
        %v855 = vadd.f32 %v820, %v848
        %v856 = vadd.f32 %v821, %v845
        %857 = vset.pattern.permute.xlu0 8
        %858 = vperm.xlu0 %857, %v581
        %v859 = vpop.permute.xlu0 %858
        %861 = vset.pattern.permute.xlu0 8
        %862 = vperm.xlu0 %861, %v582
        %v863 = vpop.permute.xlu0 %862
        %v865 = vmul.f32 %v859, %v597
        %v866 = vmul.f32 %v859, %v601
        %v867 = vmul.f32 %v863, %v597
        %v868 = vmul.f32 %v863, %v601
        %873 = vrot.lane.b32.xlu0 %v865, 120
        %v874 = vpop.permute.xlu0 %873
        %875 = vrot.lane.b32.xlu0 %v866, 120
        %v876 = vpop.permute.xlu0 %875
        %877 = vrot.lane.b32.xlu0 %v867, 120
        %v878 = vpop.permute.xlu0 %877
        %879 = vrot.lane.b32.xlu0 %v868, 120
        %v880 = vpop.permute.xlu0 %879
        %vm881 = vcmask 982016
        %v882 = vsel %vm881, %v874, %v876
        %v883 = vsel %vm881, %v878, %v880
        %v888 = vadd.f32 %v853, %v882
        %v889 = vadd.f32 %v854, %v876
        %v890 = vadd.f32 %v855, %v883
        %v891 = vadd.f32 %v856, %v880
        %892 = vset.pattern.permute.xlu0 9
        %893 = vperm.xlu0 %892, %v581
        %v894 = vpop.permute.xlu0 %893
        %896 = vset.pattern.permute.xlu0 9
        %897 = vperm.xlu0 %896, %v582
        %v898 = vpop.permute.xlu0 %897
        %v900 = vmul.f32 %v894, %v597
        %v901 = vmul.f32 %v894, %v601
        %v902 = vmul.f32 %v898, %v597
        %v903 = vmul.f32 %v898, %v601
        %908 = vrot.lane.b32.xlu0 %v900, 119
        %v909 = vpop.permute.xlu0 %908
        %910 = vrot.lane.b32.xlu0 %v901, 119
        %v911 = vpop.permute.xlu0 %910
        %912 = vrot.lane.b32.xlu0 %v902, 119
        %v913 = vpop.permute.xlu0 %912
        %914 = vrot.lane.b32.xlu0 %v903, 119
        %v915 = vpop.permute.xlu0 %914
        %vm916 = vcmask 973824
        %v917 = vsel %vm916, %v909, %v911
        %v918 = vsel %vm916, %v913, %v915
        %v923 = vadd.f32 %v888, %v917
        %v924 = vadd.f32 %v889, %v911
        %v925 = vadd.f32 %v890, %v918
        %v926 = vadd.f32 %v891, %v915
        %927 = vset.pattern.permute.xlu0 10
        %928 = vperm.xlu0 %927, %v581
        %v929 = vpop.permute.xlu0 %928
        %931 = vset.pattern.permute.xlu0 10
        %932 = vperm.xlu0 %931, %v582
        %v933 = vpop.permute.xlu0 %932
        %v935 = vmul.f32 %v929, %v597
        %v936 = vmul.f32 %v929, %v601
        %v937 = vmul.f32 %v933, %v597
        %v938 = vmul.f32 %v933, %v601
        %943 = vrot.lane.b32.xlu0 %v935, 118
        %v944 = vpop.permute.xlu0 %943
        %945 = vrot.lane.b32.xlu0 %v936, 118
        %v946 = vpop.permute.xlu0 %945
        %947 = vrot.lane.b32.xlu0 %v937, 118
        %v948 = vpop.permute.xlu0 %947
        %949 = vrot.lane.b32.xlu0 %v938, 118
        %v950 = vpop.permute.xlu0 %949
        %vm951 = vcmask 965632
        %v952 = vsel %vm951, %v944, %v946
        %v953 = vsel %vm951, %v948, %v950
        %v958 = vadd.f32 %v923, %v952
        %v959 = vadd.f32 %v924, %v946
        %v960 = vadd.f32 %v925, %v953
        %v961 = vadd.f32 %v926, %v950
        %962 = vset.pattern.permute.xlu0 11
        %963 = vperm.xlu0 %962, %v581
        %v964 = vpop.permute.xlu0 %963
        %966 = vset.pattern.permute.xlu0 11
        %967 = vperm.xlu0 %966, %v582
        %v968 = vpop.permute.xlu0 %967
        %v970 = vmul.f32 %v964, %v597
        %v971 = vmul.f32 %v964, %v601
        %v972 = vmul.f32 %v968, %v597
        %v973 = vmul.f32 %v968, %v601
        %978 = vrot.lane.b32.xlu0 %v970, 117
        %v979 = vpop.permute.xlu0 %978
        %980 = vrot.lane.b32.xlu0 %v971, 117
        %v981 = vpop.permute.xlu0 %980
        %982 = vrot.lane.b32.xlu0 %v972, 117
        %v983 = vpop.permute.xlu0 %982
        %984 = vrot.lane.b32.xlu0 %v973, 117
        %v985 = vpop.permute.xlu0 %984
        %vm986 = vcmask 957440
        %v987 = vsel %vm986, %v979, %v981
        %v988 = vsel %vm986, %v983, %v985
        %v993 = vadd.f32 %v958, %v987
        %v994 = vadd.f32 %v959, %v981
        %v995 = vadd.f32 %v960, %v988
        %v996 = vadd.f32 %v961, %v985
        %997 = vset.pattern.permute.xlu0 12
        %998 = vperm.xlu0 %997, %v581
        %v999 = vpop.permute.xlu0 %998
        %1001 = vset.pattern.permute.xlu0 12
        %1002 = vperm.xlu0 %1001, %v582
        %v1003 = vpop.permute.xlu0 %1002
        %v1005 = vmul.f32 %v999, %v597
        %v1006 = vmul.f32 %v999, %v601
        %v1007 = vmul.f32 %v1003, %v597
        %v1008 = vmul.f32 %v1003, %v601
        %1013 = vrot.lane.b32.xlu0 %v1005, 116
        %v1014 = vpop.permute.xlu0 %1013
        %1015 = vrot.lane.b32.xlu0 %v1006, 116
        %v1016 = vpop.permute.xlu0 %1015
        %1017 = vrot.lane.b32.xlu0 %v1007, 116
        %v1018 = vpop.permute.xlu0 %1017
        %1019 = vrot.lane.b32.xlu0 %v1008, 116
        %v1020 = vpop.permute.xlu0 %1019
        %vm1021 = vcmask 949248
        %v1022 = vsel %vm1021, %v1014, %v1016
        %v1023 = vsel %vm1021, %v1018, %v1020
        %v1028 = vadd.f32 %v993, %v1022
        %v1029 = vadd.f32 %v994, %v1016
        %v1030 = vadd.f32 %v995, %v1023
        %v1031 = vadd.f32 %v996, %v1020
        %1032 = vset.pattern.permute.xlu0 13
        %1033 = vperm.xlu0 %1032, %v581
        %v1034 = vpop.permute.xlu0 %1033
        %1036 = vset.pattern.permute.xlu0 13
        %1037 = vperm.xlu0 %1036, %v582
        %v1038 = vpop.permute.xlu0 %1037
        %v1040 = vmul.f32 %v1034, %v597
        %v1041 = vmul.f32 %v1034, %v601
        %v1042 = vmul.f32 %v1038, %v597
        %v1043 = vmul.f32 %v1038, %v601
        %1048 = vrot.lane.b32.xlu0 %v1040, 115
        %v1049 = vpop.permute.xlu0 %1048
        %1050 = vrot.lane.b32.xlu0 %v1041, 115
        %v1051 = vpop.permute.xlu0 %1050
        %1052 = vrot.lane.b32.xlu0 %v1042, 115
        %v1053 = vpop.permute.xlu0 %1052
        %1054 = vrot.lane.b32.xlu0 %v1043, 115
        %v1055 = vpop.permute.xlu0 %1054
        %vm1056 = vcmask 941056
        %v1057 = vsel %vm1056, %v1049, %v1051
        %v1058 = vsel %vm1056, %v1053, %v1055
        %v1063 = vadd.f32 %v1028, %v1057
        %v1064 = vadd.f32 %v1029, %v1051
        %v1065 = vadd.f32 %v1030, %v1058
        %v1066 = vadd.f32 %v1031, %v1055
        %1067 = vset.pattern.permute.xlu0 14
        %1068 = vperm.xlu0 %1067, %v581
        %v1069 = vpop.permute.xlu0 %1068
        %1071 = vset.pattern.permute.xlu0 14
        %1072 = vperm.xlu0 %1071, %v582
        %v1073 = vpop.permute.xlu0 %1072
        %v1075 = vmul.f32 %v1069, %v597
        %v1076 = vmul.f32 %v1069, %v601
        %v1077 = vmul.f32 %v1073, %v597
        %v1078 = vmul.f32 %v1073, %v601
        %1083 = vrot.lane.b32.xlu0 %v1075, 114
        %v1084 = vpop.permute.xlu0 %1083
        %1085 = vrot.lane.b32.xlu0 %v1076, 114
        %v1086 = vpop.permute.xlu0 %1085
        %1087 = vrot.lane.b32.xlu0 %v1077, 114
        %v1088 = vpop.permute.xlu0 %1087
        %1089 = vrot.lane.b32.xlu0 %v1078, 114
        %v1090 = vpop.permute.xlu0 %1089
        %vm1091 = vcmask 932864
        %v1092 = vsel %vm1091, %v1084, %v1086
        %v1093 = vsel %vm1091, %v1088, %v1090
        %v1098 = vadd.f32 %v1063, %v1092
        %v1099 = vadd.f32 %v1064, %v1086
        %v1100 = vadd.f32 %v1065, %v1093
        %v1101 = vadd.f32 %v1066, %v1090
        %v1102 = vld [vmem:[%s8] sm:$0xff]
        %v1103 = vld [vmem:[%s8 + $0x8] sm:$0xff]
        %1105 = vset.pattern.permute.xlu0 0
        %1106 = vperm.xlu0 %1105, %v1102
        %v1107 = vpop.permute.xlu0 %1106
        %1110 = vset.pattern.permute.xlu0 0
        %1111 = vperm.xlu0 %1110, %v1103
        %v1112 = vpop.permute.xlu0 %1111
        %v1114 = vadd.f32 %v1098, %v1107
        %v1115 = vadd.f32 %v1099, %v1107
        %v1116 = vadd.f32 %v1100, %v1112
        %v1117 = vadd.f32 %v1101, %v1112
        %vm1118 = vcmp.ge.f32.partialorder %v1114, 0.0
        %vm1119 = vcmp.ge.f32.partialorder %v1115, 0.0
        %vm1120 = vcmp.ge.f32.partialorder %v1116, 0.0
        %vm1121 = vcmp.ge.f32.partialorder %v1117, 0.0
        %v1122 = vmul.f32 %v1114, 0.2
        %v1123 = vmul.f32 %v1115, 0.2
        %v1124 = vmul.f32 %v1116, 0.2
        %v1125 = vmul.f32 %v1117, 0.2
        %v1126 = vsel %vm1118, %v1114, %v1122
        %v1127 = vsel %vm1119, %v1115, %v1123
        %v1128 = vsel %vm1120, %v1116, %v1124
        %v1129 = vsel %vm1121, %v1117, %v1125
        %1134 = vrot.lane.b32.xlu0 %v1126, 115
        %v1135 = vpop.permute.xlu0 %1134
        %1136 = vrot.lane.b32.xlu0 %v1127, 115
        %v1137 = vpop.permute.xlu0 %1136
        %1138 = vrot.lane.b32.xlu0 %v1128, 115
        %v1139 = vpop.permute.xlu0 %1138
        %1140 = vrot.lane.b32.xlu0 %v1129, 115
        %v1141 = vpop.permute.xlu0 %1140
        %v1142 = vsel %vm1056, %v1135, %v1137
        %v1143 = vsel %vm1056, %v1139, %v1141
        %1146 = vst [vmem:[%s526] sm:$0xff] %v1142
        %1147 = vst [vmem:[%s526 + $0x8] sm:$0xff] %v1143
        %v1148 = vlaneseq
        %v1149 = vand.u32 %v1148, 127
        %v1150 = vadd.s32 %v1149, 128
        %s1151 = ssub.s32 %s577, 13
        %v1152 = vstv %s1151
        %v1153 = vadd.s32 %v1149, %v1152
        %v1154 = vadd.s32 %v1150, %v1152
        %vm1155 = vcmp.ge.s32.totalorder %v1153, 0
        %vm1156 = vcmp.ge.s32.totalorder %v1154, 0
        %vm1157 = vcmp.lt.s32.totalorder %v1153, 256
        %vm1158 = vcmp.lt.s32.totalorder %v1154, 256
        %vm1159 = vmand %vm1155, %vm1157
        %vm1160 = vmand %vm1156, %vm1158
        %v1161 = vsel %vm1159, 1, 0
        %v1162 = vsel %vm1160, 1, 0
        %vm1163 = vcmp.eq.s32.totalorder %v1161, 1
        %vm1164 = vcmp.eq.s32.totalorder %v1162, 1
        %v1165 = vsel %vm1163, %v1126, 0.0
        %v1166 = vsel %vm1164, %v1127, 0.0
        %v1167 = vsel %vm1163, %v1128, 0.0
        %v1168 = vsel %vm1164, %v1129, 0.0
        %v1169 = vpack.c.bf16 %v1167, %v1165
        %v1170 = vpack.c.bf16 %v1168, %v1166
        %v1171 = vld [vmem:[%s4] sm:$0xff]
        %v1172 = vld [vmem:[%s4 + $0x8] sm:$0xff]
        %1175 = vrot.lane.b32.xlu0 %v1169, 127
        %v1176 = vpop.permute.xlu0 %1175
        %1177 = vrot.lane.b32.xlu0 %v1170, 127
        %v1178 = vpop.permute.xlu0 %1177
        %vm1179 = vcmask 1039360
        %v1180 = vsel %vm1179, %v1176, %v1178
        %1183 = vrot.lane.b32.xlu0 %v1169, 126
        %v1184 = vpop.permute.xlu0 %1183
        %1185 = vrot.lane.b32.xlu0 %v1170, 126
        %v1186 = vpop.permute.xlu0 %1185
        %vm1187 = vcmask 1031168
        %v1188 = vsel %vm1187, %v1184, %v1186
        %1191 = vrot.lane.b32.xlu0 %v1169, 125
        %v1192 = vpop.permute.xlu0 %1191
        %1193 = vrot.lane.b32.xlu0 %v1170, 125
        %v1194 = vpop.permute.xlu0 %1193
        %vm1195 = vcmask 1022976
        %v1196 = vsel %vm1195, %v1192, %v1194
        %1199 = vrot.lane.b32.xlu0 %v1169, 124
        %v1200 = vpop.permute.xlu0 %1199
        %1201 = vrot.lane.b32.xlu0 %v1170, 124
        %v1202 = vpop.permute.xlu0 %1201
        %vm1203 = vcmask 1014784
        %v1204 = vsel %vm1203, %v1200, %v1202
        %1207 = vrot.lane.b32.xlu0 %v1169, 123
        %v1208 = vpop.permute.xlu0 %1207
        %1209 = vrot.lane.b32.xlu0 %v1170, 123
        %v1210 = vpop.permute.xlu0 %1209
        %vm1211 = vcmask 1006592
        %v1212 = vsel %vm1211, %v1208, %v1210
        %1215 = vrot.lane.b32.xlu0 %v1169, 122
        %v1216 = vpop.permute.xlu0 %1215
        %1217 = vrot.lane.b32.xlu0 %v1170, 122
        %v1218 = vpop.permute.xlu0 %1217
        %vm1219 = vcmask 998400
        %v1220 = vsel %vm1219, %v1216, %v1218
        %1223 = vrot.lane.b32.xlu0 %v1169, 121
        %v1224 = vpop.permute.xlu0 %1223
        %1225 = vrot.lane.b32.xlu0 %v1170, 121
        %v1226 = vpop.permute.xlu0 %1225
        %vm1227 = vcmask 990208
        %v1228 = vsel %vm1227, %v1224, %v1226
        %1231 = vrot.lane.b32.xlu0 %v1169, 120
        %v1232 = vpop.permute.xlu0 %1231
        %1233 = vrot.lane.b32.xlu0 %v1170, 120
        %v1234 = vpop.permute.xlu0 %1233
        %vm1235 = vcmask 982016
        %v1236 = vsel %vm1235, %v1232, %v1234
        %1239 = vrot.lane.b32.xlu0 %v1169, 119
        %v1240 = vpop.permute.xlu0 %1239
        %1241 = vrot.lane.b32.xlu0 %v1170, 119
        %v1242 = vpop.permute.xlu0 %1241
        %vm1243 = vcmask 973824
        %v1244 = vsel %vm1243, %v1240, %v1242
        %1247 = vrot.lane.b32.xlu0 %v1169, 118
        %v1248 = vpop.permute.xlu0 %1247
        %1249 = vrot.lane.b32.xlu0 %v1170, 118
        %v1250 = vpop.permute.xlu0 %1249
        %vm1251 = vcmask 965632
        %v1252 = vsel %vm1251, %v1248, %v1250
        %s1255 = scalar_lea.vmem %s8, 32
        %v1256 = vld [vmem:[%s1255] sm:$0xff]
        %v1257 = vld [vmem:[%s1255 + $0x8] sm:$0xff]
        %1259 = vset.pattern.permute.xlu0 0
        %1260 = vperm.xlu0 %1259, %v1256
        %v1261 = vpop.permute.xlu0 %1260
        %1264 = vset.pattern.permute.xlu0 0
        %1265 = vperm.xlu0 %1264, %v1257
        %v1266 = vpop.permute.xlu0 %1265
        %v1270 = vunpack.c.l.b16 %v1171
        %v1271 = vunpack.c.h.b16 %v1171
        %v1272 = vunpack.c.l.b16 %v1172
        %v1273 = vunpack.c.h.b16 %v1172
        %v1274 = vpack.c.b16 %v1272, %v1270
        %v1275 = vpack.c.b16 %v1273, %v1271
        %vm1277 = vcmask 392192
        %v1279 = vsel %vm1277, %v1275, 0
        %1281 = vmatprep.subr.bf16.mxu0 %v1226
        %1282 = vmatpush1.bf16.msra.mxu0 %v1228
        %1283 = vmatprep.subr.bf16.mxu0 %v1218
        %1284 = vmatpush1.bf16.msra.mxu0 %v1220
        %1285 = vmatprep.subr.bf16.mxu0 %v1210
        %1286 = vmatpush1.bf16.msra.mxu0 %v1212
        %1287 = vmatprep.subr.bf16.mxu0 %v1202
        %1288 = vmatpush1.bf16.msra.mxu0 %v1204
        %1289 = vmatprep.subr.bf16.mxu0 %v1194
        %1290 = vmatpush1.bf16.msra.mxu0 %v1196
        %1291 = vmatprep.subr.bf16.mxu0 %v1186
        %1292 = vmatpush1.bf16.msra.mxu0 %v1188
        %1293 = vmatprep.subr.bf16.mxu0 %v1178
        %1294 = vmatpush1.bf16.msra.mxu0 %v1180
        %1295 = vmatprep.subr.bf16.mxu0 %v1170
        %1296 = vmatpush1.bf16.msra.mxu0 %v1169
        %1297 = vmatprep.subr.bf16.mxu0 0
        %1298 = vmatpush2.bf16.msra.mxu0 0
        %1299 = vmatprep.subr.bf16.mxu0 0
        %1300 = vmatpush2.bf16.msra.mxu0 0
        %1301 = vmatprep.subr.bf16.mxu0 0
        %1302 = vmatpush2.bf16.msra.mxu0 0
        %1303 = vmatprep.subr.bf16.mxu0 0
        %1304 = vmatpush2.bf16.msra.mxu0 0
        %1305 = vmatprep.subr.bf16.mxu0 0
        %1306 = vmatpush2.bf16.msra.mxu0 0
        %1307 = vmatprep.subr.bf16.mxu0 %v1250
        %1308 = vmatpush2.bf16.msra.mxu0 %v1252
        %1309 = vmatprep.subr.bf16.mxu0 %v1242
        %1310 = vmatpush2.bf16.msra.mxu0 %v1244
        %1311 = vmatprep.subr.bf16.mxu0 %v1234
        %1312 = vmatpush2.bf16.msra.mxu0 %v1236
        %1313 = vmatprep.mubr.bf16.mxu0 %v1279
        %1314 = vmatmul.mubr.bf16.gmra.mxu0 %v1274
        %v1315 = vpop.f32.mrf.mxu0
        %v1316 = vadd.f32 %v1261, %v1315
        %v1317 = vpop.f32.mrf.mxu0
        %v1318 = vadd.f32 %v1261, %v1317
        %v1319 = vpop.f32.mrf.mxu0
        %v1320 = vadd.f32 %v1266, %v1319
        %v1321 = vpop.f32.mrf.mxu0
        %v1322 = vadd.f32 %v1266, %v1321
        %1323 = vdwg.mxu0
        %vm1324 = vcmp.ge.f32.partialorder %v1316, 0.0
        %vm1325 = vcmp.ge.f32.partialorder %v1318, 0.0
        %vm1326 = vcmp.ge.f32.partialorder %v1320, 0.0
        %vm1327 = vcmp.ge.f32.partialorder %v1322, 0.0
        %v1328 = vmul.f32 %v1316, 0.2
        %v1329 = vmul.f32 %v1318, 0.2
        %v1330 = vmul.f32 %v1320, 0.2
        %v1331 = vmul.f32 %v1322, 0.2
        %v1332 = vsel %vm1324, %v1316, %v1328
        %v1333 = vsel %vm1325, %v1318, %v1329
        %v1334 = vsel %vm1326, %v1320, %v1330
        %v1335 = vsel %vm1327, %v1322, %v1331
        %1340 = vrot.lane.b32.xlu0 %v1332, 120
        %v1341 = vpop.permute.xlu0 %1340
        %1342 = vrot.lane.b32.xlu0 %v1333, 120
        %v1343 = vpop.permute.xlu0 %1342
        %1344 = vrot.lane.b32.xlu0 %v1334, 120
        %v1345 = vpop.permute.xlu0 %1344
        %1346 = vrot.lane.b32.xlu0 %v1335, 120
        %v1347 = vpop.permute.xlu0 %1346
        %v1348 = vsel %vm881, %v1341, %v1343
        %v1349 = vsel %vm881, %v1345, %v1347
        %1352 = vst [vmem:[%s533] sm:$0xff] %v1348
        %1353 = vst [vmem:[%s533 + $0x8] sm:$0xff] %v1349
        %s1354 = ssub.s32 %s577, 8
        %v1355 = vstv %s1354
        %v1356 = vadd.s32 %v1149, %v1355
        %v1357 = vadd.s32 %v1150, %v1355
        %vm1358 = vcmp.ge.s32.totalorder %v1356, 0
        %vm1359 = vcmp.ge.s32.totalorder %v1357, 0
        %vm1360 = vcmp.lt.s32.totalorder %v1356, 256
        %vm1361 = vcmp.lt.s32.totalorder %v1357, 256
        %vm1362 = vmand %vm1358, %vm1360
        %vm1363 = vmand %vm1359, %vm1361
        %v1364 = vsel %vm1362, 1, 0
        %v1365 = vsel %vm1363, 1, 0
        %vm1366 = vcmp.eq.s32.totalorder %v1364, 1
        %vm1367 = vcmp.eq.s32.totalorder %v1365, 1
        %v1368 = vsel %vm1366, %v1332, 0.0
        %v1369 = vsel %vm1367, %v1333, 0.0
        %v1370 = vsel %vm1366, %v1334, 0.0
        %v1371 = vsel %vm1367, %v1335, 0.0
        %v1372 = vpack.c.bf16 %v1370, %v1368
        %v1373 = vpack.c.bf16 %v1371, %v1369
        %v1374 = vld [vmem:[%s5] sm:$0xff]
        %v1375 = vld [vmem:[%s5 + $0x8] sm:$0xff]
        %1378 = vrot.lane.b32.xlu0 %v1372, 127
        %v1379 = vpop.permute.xlu0 %1378
        %1380 = vrot.lane.b32.xlu0 %v1373, 127
        %v1381 = vpop.permute.xlu0 %1380
        %v1382 = vsel %vm1179, %v1379, %v1381
        %1385 = vrot.lane.b32.xlu0 %v1372, 126
        %v1386 = vpop.permute.xlu0 %1385
        %1387 = vrot.lane.b32.xlu0 %v1373, 126
        %v1388 = vpop.permute.xlu0 %1387
        %v1389 = vsel %vm1187, %v1386, %v1388
        %1392 = vrot.lane.b32.xlu0 %v1372, 125
        %v1393 = vpop.permute.xlu0 %1392
        %1394 = vrot.lane.b32.xlu0 %v1373, 125
        %v1395 = vpop.permute.xlu0 %1394
        %v1396 = vsel %vm1195, %v1393, %v1395
        %1399 = vrot.lane.b32.xlu0 %v1372, 124
        %v1400 = vpop.permute.xlu0 %1399
        %1401 = vrot.lane.b32.xlu0 %v1373, 124
        %v1402 = vpop.permute.xlu0 %1401
        %v1403 = vsel %vm1203, %v1400, %v1402
        %1406 = vrot.lane.b32.xlu0 %v1372, 123
        %v1407 = vpop.permute.xlu0 %1406
        %1408 = vrot.lane.b32.xlu0 %v1373, 123
        %v1409 = vpop.permute.xlu0 %1408
        %v1410 = vsel %vm1211, %v1407, %v1409
        %1413 = vrot.lane.b32.xlu0 %v1372, 122
        %v1414 = vpop.permute.xlu0 %1413
        %1415 = vrot.lane.b32.xlu0 %v1373, 122
        %v1416 = vpop.permute.xlu0 %1415
        %v1417 = vsel %vm1219, %v1414, %v1416
        %1420 = vrot.lane.b32.xlu0 %v1372, 121
        %v1421 = vpop.permute.xlu0 %1420
        %1422 = vrot.lane.b32.xlu0 %v1373, 121
        %v1423 = vpop.permute.xlu0 %1422
        %v1424 = vsel %vm1227, %v1421, %v1423
        %1427 = vrot.lane.b32.xlu0 %v1372, 120
        %v1428 = vpop.permute.xlu0 %1427
        %1429 = vrot.lane.b32.xlu0 %v1373, 120
        %v1430 = vpop.permute.xlu0 %1429
        %v1431 = vsel %vm1235, %v1428, %v1430
        %1434 = vrot.lane.b32.xlu0 %v1372, 119
        %v1435 = vpop.permute.xlu0 %1434
        %1436 = vrot.lane.b32.xlu0 %v1373, 119
        %v1437 = vpop.permute.xlu0 %1436
        %v1438 = vsel %vm1243, %v1435, %v1437
        %1441 = vrot.lane.b32.xlu0 %v1372, 118
        %v1442 = vpop.permute.xlu0 %1441
        %1443 = vrot.lane.b32.xlu0 %v1373, 118
        %v1444 = vpop.permute.xlu0 %1443
        %v1445 = vsel %vm1251, %v1442, %v1444
        %s1448 = scalar_lea.vmem %s8, 64
        %v1449 = vld [vmem:[%s1448] sm:$0xff]
        %v1450 = vld [vmem:[%s1448 + $0x8] sm:$0xff]
        %1452 = vset.pattern.permute.xlu0 0
        %1453 = vperm.xlu0 %1452, %v1449
        %v1454 = vpop.permute.xlu0 %1453
        %1457 = vset.pattern.permute.xlu0 0
        %1458 = vperm.xlu0 %1457, %v1450
        %v1459 = vpop.permute.xlu0 %1458
        %v1463 = vunpack.c.l.b16 %v1374
        %v1464 = vunpack.c.h.b16 %v1374
        %v1465 = vunpack.c.l.b16 %v1375
        %v1466 = vunpack.c.h.b16 %v1375
        %v1467 = vpack.c.b16 %v1465, %v1463
        %v1468 = vpack.c.b16 %v1466, %v1464
        %v1471 = vsel %vm1277, %v1468, 0
        %1473 = vmatprep.subr.bf16.mxu0 %v1423
        %1474 = vmatpush1.bf16.msra.mxu0 %v1424
        %1475 = vmatprep.subr.bf16.mxu0 %v1416
        %1476 = vmatpush1.bf16.msra.mxu0 %v1417
        %1477 = vmatprep.subr.bf16.mxu0 %v1409
        %1478 = vmatpush1.bf16.msra.mxu0 %v1410
        %1479 = vmatprep.subr.bf16.mxu0 %v1402
        %1480 = vmatpush1.bf16.msra.mxu0 %v1403
        %1481 = vmatprep.subr.bf16.mxu0 %v1395
        %1482 = vmatpush1.bf16.msra.mxu0 %v1396
        %1483 = vmatprep.subr.bf16.mxu0 %v1388
        %1484 = vmatpush1.bf16.msra.mxu0 %v1389
        %1485 = vmatprep.subr.bf16.mxu0 %v1381
        %1486 = vmatpush1.bf16.msra.mxu0 %v1382
        %1487 = vmatprep.subr.bf16.mxu0 %v1373
        %1488 = vmatpush1.bf16.msra.mxu0 %v1372
        %1489 = vmatprep.subr.bf16.mxu0 0
        %1490 = vmatpush2.bf16.msra.mxu0 0
        %1491 = vmatprep.subr.bf16.mxu0 0
        %1492 = vmatpush2.bf16.msra.mxu0 0
        %1493 = vmatprep.subr.bf16.mxu0 0
        %1494 = vmatpush2.bf16.msra.mxu0 0
        %1495 = vmatprep.subr.bf16.mxu0 0
        %1496 = vmatpush2.bf16.msra.mxu0 0
        %1497 = vmatprep.subr.bf16.mxu0 0
        %1498 = vmatpush2.bf16.msra.mxu0 0
        %1499 = vmatprep.subr.bf16.mxu0 %v1444
        %1500 = vmatpush2.bf16.msra.mxu0 %v1445
        %1501 = vmatprep.subr.bf16.mxu0 %v1437
        %1502 = vmatpush2.bf16.msra.mxu0 %v1438
        %1503 = vmatprep.subr.bf16.mxu0 %v1430
        %1504 = vmatpush2.bf16.msra.mxu0 %v1431
        %1505 = vmatprep.mubr.bf16.mxu0 %v1471
        %1506 = vmatmul.mubr.bf16.gmra.mxu0 %v1467
        %v1507 = vpop.f32.mrf.mxu0
        %v1508 = vadd.f32 %v1454, %v1507
        %v1509 = vpop.f32.mrf.mxu0
        %v1510 = vadd.f32 %v1454, %v1509
        %v1511 = vpop.f32.mrf.mxu0
        %v1512 = vadd.f32 %v1459, %v1511
        %v1513 = vpop.f32.mrf.mxu0
        %v1514 = vadd.f32 %v1459, %v1513
        %1515 = vdwg.mxu0
        %vm1516 = vcmp.ge.f32.partialorder %v1508, 0.0
        %vm1517 = vcmp.ge.f32.partialorder %v1510, 0.0
        %vm1518 = vcmp.ge.f32.partialorder %v1512, 0.0
        %vm1519 = vcmp.ge.f32.partialorder %v1514, 0.0
        %v1520 = vmul.f32 %v1508, 0.2
        %v1521 = vmul.f32 %v1510, 0.2
        %v1522 = vmul.f32 %v1512, 0.2
        %v1523 = vmul.f32 %v1514, 0.2
        %v1524 = vsel %vm1516, %v1508, %v1520
        %v1525 = vsel %vm1517, %v1510, %v1521
        %v1526 = vsel %vm1518, %v1512, %v1522
        %v1527 = vsel %vm1519, %v1514, %v1523
        %1532 = vrot.lane.b32.xlu0 %v1524, 125
        %v1533 = vpop.permute.xlu0 %1532
        %1534 = vrot.lane.b32.xlu0 %v1525, 125
        %v1535 = vpop.permute.xlu0 %1534
        %1536 = vrot.lane.b32.xlu0 %v1526, 125
        %v1537 = vpop.permute.xlu0 %1536
        %1538 = vrot.lane.b32.xlu0 %v1527, 125
        %v1539 = vpop.permute.xlu0 %1538
        %v1540 = vsel %vm706, %v1533, %v1535
        %v1541 = vsel %vm706, %v1537, %v1539
        %1544 = vst [vmem:[%s540] sm:$0xff] %v1540
        %1545 = vst [vmem:[%s540 + $0x8] sm:$0xff] %v1541
        %s1546 = ssub.s32 %s577, 3
        %v1547 = vstv %s1546
        %v1548 = vadd.s32 %v1149, %v1547
        %v1549 = vadd.s32 %v1150, %v1547
        %vm1550 = vcmp.ge.s32.totalorder %v1548, 0
        %vm1551 = vcmp.ge.s32.totalorder %v1549, 0
        %vm1552 = vcmp.lt.s32.totalorder %v1548, 256
        %vm1553 = vcmp.lt.s32.totalorder %v1549, 256
        %vm1554 = vmand %vm1550, %vm1552
        %vm1555 = vmand %vm1551, %vm1553
        %v1556 = vsel %vm1554, 1, 0
        %v1557 = vsel %vm1555, 1, 0
        %vm1558 = vcmp.eq.s32.totalorder %v1556, 1
        %vm1559 = vcmp.eq.s32.totalorder %v1557, 1
        %v1560 = vsel %vm1558, %v1524, 0.0
        %v1561 = vsel %vm1559, %v1525, 0.0
        %v1562 = vsel %vm1558, %v1526, 0.0
        %v1563 = vsel %vm1559, %v1527, 0.0
        %v1564 = vpack.c.bf16 %v1562, %v1560
        %v1565 = vpack.c.bf16 %v1563, %v1561
        %v1566 = vld [vmem:[%s6] sm:$0xf]
        %v1567 = vld [vmem:[%s6 + $0x4] sm:$0xf]
        %v1568 = vld [vmem:[%s6 + $0x8] sm:$0xf]
        %v1569 = vld [vmem:[%s6 + $0xc] sm:$0xf]
        %1572 = vrot.lane.b32.xlu0 %v1564, 127
        %v1573 = vpop.permute.xlu0 %1572
        %1574 = vrot.lane.b32.xlu0 %v1565, 127
        %v1575 = vpop.permute.xlu0 %1574
        %v1576 = vsel %vm1179, %v1573, %v1575
        %1579 = vrot.lane.b32.xlu0 %v1564, 126
        %v1580 = vpop.permute.xlu0 %1579
        %1581 = vrot.lane.b32.xlu0 %v1565, 126
        %v1582 = vpop.permute.xlu0 %1581
        %v1583 = vsel %vm1187, %v1580, %v1582
        %1586 = vrot.lane.b32.xlu0 %v1564, 125
        %v1587 = vpop.permute.xlu0 %1586
        %1588 = vrot.lane.b32.xlu0 %v1565, 125
        %v1589 = vpop.permute.xlu0 %1588
        %v1590 = vsel %vm1195, %v1587, %v1589
        %1593 = vrot.lane.b32.xlu0 %v1564, 124
        %v1594 = vpop.permute.xlu0 %1593
        %1595 = vrot.lane.b32.xlu0 %v1565, 124
        %v1596 = vpop.permute.xlu0 %1595
        %v1597 = vsel %vm1203, %v1594, %v1596
        %s1600 = scalar_lea.vmem %s8, 96
        %v1601 = vld [vmem:[%s1600] sm:$0xff]
        %v1602 = vld [vmem:[%s1600 + $0x8] sm:$0xff]
        %v1603 = vld [vmem:[%s1600 + $0x10] sm:$0xff]
        %v1604 = vld [vmem:[%s1600 + $0x18] sm:$0xff]
        %1606 = vset.pattern.permute.xlu0 0
        %1607 = vperm.xlu0 %1606, %v1601
        %v1608 = vpop.permute.xlu0 %1607
        %1611 = vset.pattern.permute.xlu0 0
        %1612 = vperm.xlu0 %1611, %v1602
        %v1613 = vpop.permute.xlu0 %1612
        %1616 = vset.pattern.permute.xlu0 0
        %1617 = vperm.xlu0 %1616, %v1603
        %v1618 = vpop.permute.xlu0 %1617
        %1621 = vset.pattern.permute.xlu0 0
        %1622 = vperm.xlu0 %1621, %v1604
        %v1623 = vpop.permute.xlu0 %1622
        %v1629 = vunpack.c.l.b16 %v1566
        %v1630 = vunpack.c.l.b16 %v1567
        %v1631 = vunpack.c.l.b16 %v1568
        %v1632 = vunpack.c.l.b16 %v1569
        %v1633 = vpack.c.b16 %v1630, %v1629
        %v1634 = vpack.c.b16 %v1632, %v1631
        %vm1635 = vcmask 654336
        %v1637 = vsel %vm1635, %v1633, 0
        %v1640 = vsel %vm1635, %v1634, 0
        %1642 = vmatprep.subr.bf16.mxu0 0
        %1643 = vmatpush1.bf16.msra.mxu0 0
        %1644 = vmatprep.subr.bf16.mxu0 0
        %1645 = vmatpush1.bf16.msra.mxu0 0
        %1646 = vmatprep.subr.bf16.mxu0 0
        %1647 = vmatpush1.bf16.msra.mxu0 0
        %1648 = vmatprep.subr.bf16.mxu0 %v1596
        %1649 = vmatpush1.bf16.msra.mxu0 %v1597
        %1650 = vmatprep.subr.bf16.mxu0 %v1589
        %1651 = vmatpush1.bf16.msra.mxu0 %v1590
        %1652 = vmatprep.subr.bf16.mxu0 %v1582
        %1653 = vmatpush1.bf16.msra.mxu0 %v1583
        %1654 = vmatprep.subr.bf16.mxu0 %v1575
        %1655 = vmatpush1.bf16.msra.mxu0 %v1576
        %1656 = vmatprep.subr.bf16.mxu0 %v1565
        %1657 = vmatpush1.bf16.msra.mxu0 %v1564
        %1658 = vmatprep.subr.bf16.mxu0 0
        %1659 = vmatpush2.bf16.msra.mxu0 0
        %1660 = vmatprep.subr.bf16.mxu0 0
        %1661 = vmatpush2.bf16.msra.mxu0 0
        %1662 = vmatprep.subr.bf16.mxu0 0
        %1663 = vmatpush2.bf16.msra.mxu0 0
        %1664 = vmatprep.subr.bf16.mxu0 0
        %1665 = vmatpush2.bf16.msra.mxu0 0
        %1666 = vmatprep.subr.bf16.mxu0 0
        %1667 = vmatpush2.bf16.msra.mxu0 0
        %1668 = vmatprep.subr.bf16.mxu0 0
        %1669 = vmatpush2.bf16.msra.mxu0 0
        %1670 = vmatprep.subr.bf16.mxu0 0
        %1671 = vmatpush2.bf16.msra.mxu0 0
        %1672 = vmatprep.subr.bf16.mxu0 0
        %1673 = vmatpush2.bf16.msra.mxu0 0
        %1674 = vmatprep.mubr.bf16.mxu0 0
        %1675 = vmatmul.mubr.bf16.gmra.mxu0 %v1637
        %v1676 = vpop.f32.mrf.mxu0
        %v1677 = vadd.f32 %v1608, %v1676
        %v1678 = vpop.f32.mrf.mxu0
        %v1679 = vadd.f32 %v1608, %v1678
        %v1680 = vpop.f32.mrf.mxu0
        %v1681 = vadd.f32 %v1613, %v1680
        %v1682 = vpop.f32.mrf.mxu0
        %v1683 = vadd.f32 %v1613, %v1682
        %1684 = vmatprep.mubr.bf16.mxu0 0
        %1685 = vmatmul.mubr.bf16.gmra.mxu0 %v1640
        %v1686 = vpop.f32.mrf.mxu0
        %v1687 = vadd.f32 %v1618, %v1686
        %v1688 = vpop.f32.mrf.mxu0
        %v1689 = vadd.f32 %v1618, %v1688
        %v1690 = vpop.f32.mrf.mxu0
        %v1691 = vadd.f32 %v1623, %v1690
        %v1692 = vpop.f32.mrf.mxu0
        %v1693 = vadd.f32 %v1623, %v1692
        %1694 = vdwg.mxu0
        %vm1695 = vcmp.ge.f32.partialorder %v1677, 0.0
        %vm1696 = vcmp.ge.f32.partialorder %v1679, 0.0
        %vm1697 = vcmp.ge.f32.partialorder %v1681, 0.0
        %vm1698 = vcmp.ge.f32.partialorder %v1683, 0.0
        %vm1699 = vcmp.ge.f32.partialorder %v1687, 0.0
        %vm1700 = vcmp.ge.f32.partialorder %v1689, 0.0
        %vm1701 = vcmp.ge.f32.partialorder %v1691, 0.0
        %vm1702 = vcmp.ge.f32.partialorder %v1693, 0.0
        %v1703 = vmul.f32 %v1677, 0.2
        %v1704 = vmul.f32 %v1679, 0.2
        %v1705 = vmul.f32 %v1681, 0.2
        %v1706 = vmul.f32 %v1683, 0.2
        %v1707 = vmul.f32 %v1687, 0.2
        %v1708 = vmul.f32 %v1689, 0.2
        %v1709 = vmul.f32 %v1691, 0.2
        %v1710 = vmul.f32 %v1693, 0.2
        %v1711 = vsel %vm1695, %v1677, %v1703
        %v1712 = vsel %vm1696, %v1679, %v1704
        %v1713 = vsel %vm1697, %v1681, %v1705
        %v1714 = vsel %vm1698, %v1683, %v1706
        %v1715 = vsel %vm1699, %v1687, %v1707
        %v1716 = vsel %vm1700, %v1689, %v1708
        %v1717 = vsel %vm1701, %v1691, %v1709
        %v1718 = vsel %vm1702, %v1693, %v1710
        %1727 = vrot.lane.b32.xlu0 %v1711, 127
        %v1728 = vpop.permute.xlu0 %1727
        %1729 = vrot.lane.b32.xlu0 %v1712, 127
        %v1730 = vpop.permute.xlu0 %1729
        %1731 = vrot.lane.b32.xlu0 %v1713, 127
        %v1732 = vpop.permute.xlu0 %1731
        %1733 = vrot.lane.b32.xlu0 %v1714, 127
        %v1734 = vpop.permute.xlu0 %1733
        %1735 = vrot.lane.b32.xlu0 %v1715, 127
        %v1736 = vpop.permute.xlu0 %1735
        %1737 = vrot.lane.b32.xlu0 %v1716, 127
        %v1738 = vpop.permute.xlu0 %1737
        %1739 = vrot.lane.b32.xlu0 %v1717, 127
        %v1740 = vpop.permute.xlu0 %1739
        %1741 = vrot.lane.b32.xlu0 %v1718, 127
        %v1742 = vpop.permute.xlu0 %1741
        %v1743 = vsel %vm636, %v1728, %v1730
        %v1744 = vsel %vm636, %v1732, %v1734
        %v1745 = vsel %vm636, %v1736, %v1738
        %v1746 = vsel %vm636, %v1740, %v1742
        %1751 = vst [vmem:[%s547] sm:$0xff] %v1743
        %1752 = vst [vmem:[%s547 + $0x8] sm:$0xff] %v1744
        %1753 = vst [vmem:[%s547 + $0x10] sm:$0xff] %v1745
        %1754 = vst [vmem:[%s547 + $0x18] sm:$0xff] %v1746
        %s1755 = ssub.s32 %s577, 1
        %v1756 = vstv %s1755
        %v1757 = vadd.s32 %v1149, %v1756
        %v1758 = vadd.s32 %v1150, %v1756
        %vm1759 = vcmp.ge.s32.totalorder %v1757, 0
        %vm1760 = vcmp.ge.s32.totalorder %v1758, 0
        %vm1761 = vcmp.lt.s32.totalorder %v1757, 256
        %vm1762 = vcmp.lt.s32.totalorder %v1758, 256
        %vm1763 = vmand %vm1759, %vm1761
        %vm1764 = vmand %vm1760, %vm1762
        %v1765 = vsel %vm1763, 1, 0
        %v1766 = vsel %vm1764, 1, 0
        %vm1767 = vcmp.eq.s32.totalorder %v1765, 1
        %vm1768 = vcmp.eq.s32.totalorder %v1766, 1
        %v1769 = vsel %vm1767, %v1711, 0.0
        %v1770 = vsel %vm1768, %v1712, 0.0
        %v1771 = vsel %vm1767, %v1713, 0.0
        %v1772 = vsel %vm1768, %v1714, 0.0
        %v1773 = vsel %vm1767, %v1715, 0.0
        %v1774 = vsel %vm1768, %v1716, 0.0
        %v1775 = vsel %vm1767, %v1717, 0.0
        %v1776 = vsel %vm1768, %v1718, 0.0
        %v1777 = vpack.c.bf16 %v1771, %v1769
        %v1778 = vpack.c.bf16 %v1772, %v1770
        %v1779 = vpack.c.bf16 %v1775, %v1773
        %v1780 = vpack.c.bf16 %v1776, %v1774
        %v1781 = vld [vmem:[%s7] sm:$0x1]
        %1786 = vrot.lane.b32.xlu0 %v1777, 127
        %v1787 = vpop.permute.xlu0 %1786
        %1788 = vrot.lane.b32.xlu0 %v1778, 127
        %v1789 = vpop.permute.xlu0 %1788
        %1790 = vrot.lane.b32.xlu0 %v1779, 127
        %v1791 = vpop.permute.xlu0 %1790
        %1792 = vrot.lane.b32.xlu0 %v1780, 127
        %v1793 = vpop.permute.xlu0 %1792
        %v1794 = vsel %vm1179, %v1787, %v1789
        %v1795 = vsel %vm1179, %v1791, %v1793
        %1798 = vrot.lane.b32.xlu0 %v1777, 126
        %v1799 = vpop.permute.xlu0 %1798
        %1800 = vrot.lane.b32.xlu0 %v1778, 126
        %v1801 = vpop.permute.xlu0 %1800
        %1802 = vrot.lane.b32.xlu0 %v1779, 126
        %v1803 = vpop.permute.xlu0 %1802
        %1804 = vrot.lane.b32.xlu0 %v1780, 126
        %v1805 = vpop.permute.xlu0 %1804
        %v1806 = vsel %vm1187, %v1799, %v1801
        %v1807 = vsel %vm1187, %v1803, %v1805
        %s1810 = scalar_lea.vmem %s8, 128
        %v1811 = vld [vmem:[%s1810] sm:$0x1]
        %1813 = vset.pattern.permute.xlu0 0
        %1814 = vperm.xlu0 %1813, %v1811
        %v1815 = vpop.permute.xlu0 %1814
        %vm1817 = vcmask 785408
        %v1819 = vsel %vm1817, %v1781, 0
        %1821 = vmatprep.subr.bf16.mxu0 0
        %1822 = vmatpush1.bf16.msra.mxu0 0
        %1823 = vmatprep.subr.bf16.mxu0 0
        %1824 = vmatpush1.bf16.msra.mxu0 0
        %1825 = vmatprep.subr.bf16.mxu0 0
        %1826 = vmatpush1.bf16.msra.mxu0 %v1807
        %1827 = vmatprep.subr.bf16.mxu0 0
        %1828 = vmatpush1.bf16.msra.mxu0 %v1806
        %1829 = vmatprep.subr.bf16.mxu0 0
        %1830 = vmatpush1.bf16.msra.mxu0 %v1795
        %1831 = vmatprep.subr.bf16.mxu0 0
        %1832 = vmatpush1.bf16.msra.mxu0 %v1794
        %1833 = vmatprep.subr.bf16.mxu0 0
        %1834 = vmatpush1.bf16.msra.mxu0 %v1779
        %1835 = vmatprep.subr.bf16.mxu0 0
        %1836 = vmatpush1.bf16.msra.mxu0 %v1777
        %1837 = vmatprep.subr.bf16.mxu0 0
        %1838 = vmatpush2.bf16.msra.mxu0 0
        %1839 = vmatprep.subr.bf16.mxu0 0
        %1840 = vmatpush2.bf16.msra.mxu0 0
        %1841 = vmatprep.subr.bf16.mxu0 0
        %1842 = vmatpush2.bf16.msra.mxu0 0
        %1843 = vmatprep.subr.bf16.mxu0 0
        %1844 = vmatpush2.bf16.msra.mxu0 0
        %1845 = vmatprep.subr.bf16.mxu0 0
        %1846 = vmatpush2.bf16.msra.mxu0 0
        %1847 = vmatprep.subr.bf16.mxu0 0
        %1848 = vmatpush2.bf16.msra.mxu0 0
        %1849 = vmatprep.subr.bf16.mxu0 0
        %1850 = vmatpush2.bf16.msra.mxu0 0
        %1851 = vmatprep.subr.bf16.mxu0 0
        %1852 = vmatpush2.bf16.msra.mxu0 0
        %1853 = vmatprep.mubr.bf16.mxu0 0
        %1854 = vmatmul.mubr.bf16.gmra.mxu0 %v1819
        %v1855 = vpop.f32.mrf.mxu0
        %v1856 = vadd.f32 %v1815, %v1855
        %v1857 = vpop.f32.mrf.mxu0
        %v1858 = vpop.f32.mrf.mxu0
        %v1859 = vpop.f32.mrf.mxu0
        %1860 = vdwg.mxu0
        %1861 = vst [vmem:[%s553] sm:$0x1] %v1856
        %p1862 = scmp.eq.s32.totalorder %s43, 0
        // Predicated region
        $region57: #{tpu_custom_call.1} parent=55 // pred_check
          %p1863 = pneg %p1862
        $region58: #{tpu_custom_call.1} parent=55 // pred_check_branch
          %1865 = sbr.rel (%p1863) target = $region60
        $region59: #{tpu_custom_call.1} parent=55 // pred_region
          %v1866 = vld [vmem:[%s571] sm:$0x3]
          %v1867 = vld [vmem:[%s575] sm:$0x3]
          %1869 = vrot.lane.b32.xlu0 %v1866, 127
          %v1870 = vpop.permute.xlu0 %1869
          %v1871 = vrot.slane %v1870, 1
          %v1872 = vsel %vm636, %v1870, %v1871
          %v1874 = vadd.f32 %v1867, %v1872
          %1876 = vrot.lane.b32.xlu0 %v1867, 127
          %v1877 = vpop.permute.xlu0 %1876
          %v1878 = vrot.slane %v1877, 1
          %v1879 = vsel %vm636, %v1877, %v1878
          %v1881 = vadd.f32 %v1874, %v1879
          %1882 = vrot.lane.b32.xlu0 %v1866, 126
          %v1883 = vpop.permute.xlu0 %1882
          %v1884 = vrot.slane %v1883, 1
          %v1885 = vsel %vm671, %v1883, %v1884
          %v1887 = vadd.f32 %v1881, %v1885
          %vm1888 = vcmp.eq.s32.totalorder %v1149, 0
          %vm1889 = vcmp.eq.s32.totalorder %v1149, 127
          %vm1890 = vmor %vm1888, %vm1889
          %v1891 = vsel %vm1890, 0.33333334, 0.25
          %v1892 = vmul.f32 %v1887, %v1891
          %1893 = vst [vmem:[%s559] sm:$0x1] %v1892
        $region60: #{tpu_custom_call.1} parent=55 // pred_fallthru
          _
        %s1894 = sand.u32 %s268, 1
        %s1895 = scalar_lea.sflag [#allocation3], %s1894
        %s1896 = sand.u32 %s268, 1
        %s1897 = smul.addr %s1896, 16
        %s1898 = scalar_lea.vmem [#allocation2], %s1897
        %s1899 = sand.u32 %s38, 1
        %s1900 = scalar_lea.sflag [#allocation5], %s1899
        %s1901 = sand.u32 %s296, 1
        %s1902 = smul.addr %s1901, 16
        %s1903 = scalar_lea.vmem [#allocation4], %s1902
        %s1904 = sand.u32 %s38, 1
        %s1905 = scalar_lea.sflag [#allocation5], %s1904
        %s1906 = sand.u32 %s324, 1
        %s1907 = smul.addr %s1906, 16
        %s1908 = scalar_lea.vmem [#allocation6], %s1907
        %s1909 = sand.u32 %s38, 1
        %s1910 = scalar_lea.sflag [#allocation8], %s1909
        %s1911 = sand.u32 %s352, 1
        %s1912 = smul.addr %s1911, 32
        %s1913 = scalar_lea.vmem [#allocation7], %s1912
        %s1914 = sand.u32 %s38, 1
        %s1915 = scalar_lea.sflag [#allocation8], %s1914
        %s1916 = sand.u32 %s380, 1
        %s1917 = scalar_lea.vmem [#allocation9], %s1916
        %s1918 = sand.u32 %s406, 1
        %s1919 = scalar_lea.sflag [#allocation11], %s1918
        %s1920 = sand.u32 %s406, 1
        %s1921 = scalar_lea.vmem [#allocation10], %s1920
        // Predicated region
        $region61: #{tpu_custom_call.1} parent=55 // pred_check
          %p1922 = pneg %p278
        $region62: #{tpu_custom_call.1} parent=55 // pred_check_branch
          %1924 = sbr.rel (%p1922) target = $region64
        $region63: #{tpu_custom_call.1} parent=55 // pred_region
          %s1926 = ssub.s32 256, 256
          %1927 = vsyncadd %s1895, %s1926
          %s1928 = smul.addr %s42, 4
          %s1929 = sadd.s32 %s43, %s1928
          %s1930 = smul.addr %s1929, 128
          %s1931 = scalar_lea.hbm %s9, %s1930
          %s1932 = sshll.u32 %s1898, 4
          %s1933 = int_to_ptr.vmem [resolvable:$true] %s1932
          %1938 = dma.vmem_to_hbm [thread:$0]  %s1933, 256, %s1931, %s1895, 128, 256, 8
        $region64: #{tpu_custom_call.1} parent=55 // pred_fallthru
          _
        // Predicated region
        $region65: #{tpu_custom_call.1} parent=55 // pred_check
          %p1939 = pneg %p306
        $region66: #{tpu_custom_call.1} parent=55 // pred_check_branch
          %1941 = sbr.rel (%p1939) target = $region68
        $region67: #{tpu_custom_call.1} parent=55 // pred_region
          %s1943 = ssub.s32 256, 256
          %1944 = vsyncadd %s1900, %s1943
          %s1945 = smul.addr %s42, 4
          %s1946 = sadd.s32 %s43, %s1945
          %s1947 = smul.addr %s1946, 128
          %s1948 = scalar_lea.hbm %s10, %s1947
          %s1949 = sshll.u32 %s1903, 4
          %s1950 = int_to_ptr.vmem [resolvable:$true] %s1949
          %1955 = dma.vmem_to_hbm [thread:$0]  %s1950, 256, %s1948, %s1900, 128, 256, 8
        $region68: #{tpu_custom_call.1} parent=55 // pred_fallthru
          _
        // Predicated region
        $region69: #{tpu_custom_call.1} parent=55 // pred_check
          %p1956 = pneg %p334
        $region70: #{tpu_custom_call.1} parent=55 // pred_check_branch
          %1958 = sbr.rel (%p1956) target = $region72
        $region71: #{tpu_custom_call.1} parent=55 // pred_region
          %s1960 = ssub.s32 256, 256
          %1961 = vsyncadd %s1905, %s1960
          %s1962 = smul.addr %s42, 4
          %s1963 = sadd.s32 %s43, %s1962
          %s1964 = smul.addr %s1963, 128
          %s1965 = scalar_lea.hbm %s11, %s1964
          %s1966 = sshll.u32 %s1908, 4
          %s1967 = int_to_ptr.vmem [resolvable:$true] %s1966
          %1972 = dma.vmem_to_hbm [thread:$0]  %s1967, 256, %s1965, %s1905, 128, 256, 8
        $region72: #{tpu_custom_call.1} parent=55 // pred_fallthru
          _
        // Predicated region
        $region73: #{tpu_custom_call.1} parent=55 // pred_check
          %p1973 = pneg %p362
        $region74: #{tpu_custom_call.1} parent=55 // pred_check_branch
          %1975 = sbr.rel (%p1973) target = $region76
        $region75: #{tpu_custom_call.1} parent=55 // pred_region
          %s1977 = ssub.s32 512, 512
          %1978 = vsyncadd %s1910, %s1977
          %s1979 = smul.addr %s42, 8
          %s1980 = sadd.s32 %s43, %s1979
          %s1981 = smul.addr %s1980, 128
          %s1982 = scalar_lea.hbm %s12, %s1981
          %s1983 = sshll.u32 %s1913, 4
          %s1984 = int_to_ptr.vmem [resolvable:$true] %s1983
          %1989 = dma.vmem_to_hbm [thread:$0]  %s1984, 512, %s1982, %s1910, 128, 256, 8
        $region76: #{tpu_custom_call.1} parent=55 // pred_fallthru
          _
        // Predicated region
        $region77: #{tpu_custom_call.1} parent=55 // pred_check
          %p1990 = pneg %p390
        $region78: #{tpu_custom_call.1} parent=55 // pred_check_branch
          %1992 = sbr.rel (%p1990) target = $region80
        $region79: #{tpu_custom_call.1} parent=55 // pred_region
          %s1994 = ssub.s32 16, 16
          %1995 = vsyncadd %s1915, %s1994
          %s1996 = smul.addr %s42, 2
          %s1997 = sadd.s32 %s43, %s1996
          %s1998 = smul.addr %s1997, 16
          %s1999 = scalar_lea.hbm %s13, %s1998
          %s2001 = sshll.u32 %s1917, 4
          %s2002 = int_to_ptr.vmem [resolvable:$true] %s2001
          %2004 = dma.vmem_to_hbm [thread:$0]  %s2002, 16, %s1999, %s1915
        $region80: #{tpu_custom_call.1} parent=55 // pred_fallthru
          _
        // Predicated region
        $region81: #{tpu_custom_call.1} parent=55 // pred_check
          %p2005 = pneg %p416
        $region82: #{tpu_custom_call.1} parent=55 // pred_check_branch
          %2007 = sbr.rel (%p2005) target = $region84
        $region83: #{tpu_custom_call.1} parent=55 // pred_region
          %s2009 = ssub.s32 16, 16
          %2010 = vsyncadd %s1919, %s2009
          %s2011 = smul.addr %s42, 16
          %s2012 = scalar_lea.hbm %s14, %s2011
          %s2014 = sshll.u32 %s1921, 4
          %s2015 = int_to_ptr.vmem [resolvable:$true] %s2014
          %2017 = dma.vmem_to_hbm [thread:$0]  %s2015, 16, %s2012, %s1919
        $region84: #{tpu_custom_call.1} parent=55 // pred_fallthru
          _
      $region56: #{tpu_custom_call.1} parent=5 // pred_fallthru
        _
      %p2018 = scmp.le.s32.totalorder 2, %s33
      // Predicated region
      $region85: #{tpu_custom_call.1} parent=5 // pred_check
        %p2019 = pneg %p2018
      $region86: #{tpu_custom_call.1} parent=5 // pred_check_branch
        %2021 = sbr.rel (%p2019) target = $region88
      $region87: #{tpu_custom_call.1} parent=5 // pred_region
        %s2022 = ssub.s32 %s33, 2
        // Predicated region
        $region89: #{tpu_custom_call.1} parent=87 // pred_check
          %p2023 = pneg %p284
        $region90: #{tpu_custom_call.1} parent=87 // pred_check_branch
          %2025 = sbr.rel (%p2023) target = $region92
        $region91: #{tpu_custom_call.1} parent=87 // pred_region
          %s2026 = sand.u32 %s269, 1
          %s2027 = scalar_lea.sflag [#allocation3], %s2026
          %s2028 = sand.u32 %s269, 1
          %s2029 = smul.addr %s2028, 16
          %s2030 = scalar_lea.vmem [#allocation2], %s2029
          %2031 = dma.done %s2027, 256
        $region92: #{tpu_custom_call.1} parent=87 // pred_fallthru
          _
        // Predicated region
        $region93: #{tpu_custom_call.1} parent=87 // pred_check
          %p2032 = pneg %p312
        $region94: #{tpu_custom_call.1} parent=87 // pred_check_branch
          %2034 = sbr.rel (%p2032) target = $region96
        $region95: #{tpu_custom_call.1} parent=87 // pred_region
          %s2035 = sand.u32 %s39, 1
          %s2036 = scalar_lea.sflag [#allocation5], %s2035
          %s2037 = sand.u32 %s297, 1
          %s2038 = smul.addr %s2037, 16
          %s2039 = scalar_lea.vmem [#allocation4], %s2038
          %2040 = dma.done %s2036, 256
        $region96: #{tpu_custom_call.1} parent=87 // pred_fallthru
          _
        // Predicated region
        $region97: #{tpu_custom_call.1} parent=87 // pred_check
          %p2041 = pneg %p340
        $region98: #{tpu_custom_call.1} parent=87 // pred_check_branch
          %2043 = sbr.rel (%p2041) target = $region100
        $region99: #{tpu_custom_call.1} parent=87 // pred_region
          %s2044 = sand.u32 %s39, 1
          %s2045 = scalar_lea.sflag [#allocation5], %s2044
          %s2046 = sand.u32 %s325, 1
          %s2047 = smul.addr %s2046, 16
          %s2048 = scalar_lea.vmem [#allocation6], %s2047
          %2049 = dma.done %s2045, 256
        $region100: #{tpu_custom_call.1} parent=87 // pred_fallthru
          _
        // Predicated region
        $region101: #{tpu_custom_call.1} parent=87 // pred_check
          %p2050 = pneg %p368
        $region102: #{tpu_custom_call.1} parent=87 // pred_check_branch
          %2052 = sbr.rel (%p2050) target = $region104
        $region103: #{tpu_custom_call.1} parent=87 // pred_region
          %s2053 = sand.u32 %s39, 1
          %s2054 = scalar_lea.sflag [#allocation8], %s2053
          %s2055 = sand.u32 %s353, 1
          %s2056 = smul.addr %s2055, 32
          %s2057 = scalar_lea.vmem [#allocation7], %s2056
          %2058 = dma.done %s2054, 512
        $region104: #{tpu_custom_call.1} parent=87 // pred_fallthru
          _
        // Predicated region
        $region105: #{tpu_custom_call.1} parent=87 // pred_check
          %p2059 = pneg %p396
        $region106: #{tpu_custom_call.1} parent=87 // pred_check_branch
          %2061 = sbr.rel (%p2059) target = $region108
        $region107: #{tpu_custom_call.1} parent=87 // pred_region
          %s2062 = sand.u32 %s39, 1
          %s2063 = scalar_lea.sflag [#allocation8], %s2062
          %s2064 = sand.u32 %s381, 1
          %s2065 = scalar_lea.vmem [#allocation9], %s2064
          %2066 = dma.done %s2063, 16
        $region108: #{tpu_custom_call.1} parent=87 // pred_fallthru
          _
        // Predicated region
        $region109: #{tpu_custom_call.1} parent=87 // pred_check
          %p2067 = pneg %p422
        $region110: #{tpu_custom_call.1} parent=87 // pred_check_branch
          %2069 = sbr.rel (%p2067) target = $region112
        $region111: #{tpu_custom_call.1} parent=87 // pred_region
          %s2070 = sand.u32 %s407, 1
          %s2071 = scalar_lea.sflag [#allocation11], %s2070
          %s2072 = sand.u32 %s407, 1
          %s2073 = scalar_lea.vmem [#allocation10], %s2072
          %2074 = dma.done %s2071, 16
        $region112: #{tpu_custom_call.1} parent=87 // pred_fallthru
          _
      $region88: #{tpu_custom_call.1} parent=5 // pred_fallthru
        _
    $region6: #{tpu_custom_call.1} parent=1 // loop_footer
      %s37 = sadd.s32 1, %s33
    $region7: #{tpu_custom_call.1} parent=1 // loop_footer_branch
      %32 = sbr.rel target = $region3
    $region8: #{tpu_custom_call.1} parent=1 // loop_exit
      _
    %2075 = vsyncpa [#allocation3], 1
    %s2076 = scalar_lea.sflag [#allocation3], 1
    %2077 = vsyncpa %s2076, 1
    %2078 = vsyncpa [#allocation5], 1
    %s2079 = scalar_lea.sflag [#allocation5], 1
    %2080 = vsyncpa %s2079, 1
    %2081 = vsyncpa [#allocation8], 1
    %s2082 = scalar_lea.sflag [#allocation8], 1
    %2083 = vsyncpa %s2082, 1
    %2084 = vsyncpa [#allocation11], 1
    %s2085 = scalar_lea.sflag [#allocation11], 1
    %2086 = vsyncpa %s2085, 1

</llo_original>
